<compile_context>
chip_gen: v6e
topology: v6e:2x2x1
jax: 0.10.0
libtpu: 0.0.40
codegen_flags: <defaults>
</compile_context>

<pallas_src>
import functools

import jax
import jax.numpy as jnp
from jax import lax
from jax.experimental import pallas as pl
from jax.experimental.pallas import tpu as pltpu


def _sigmoid(x):
    return 1.0 / (1.0 + jnp.exp(-x))


def _bilstm_kernel(T, B, F, H, O,
                   x_ref, wih_ref, whh_ref, bias_ref, wout_ref, bout_ref,
                   out_ref, xg_scr, rec_scr, acc_scr):
    d = pl.program_id(0)                      # 0 = forward, 1 = backward direction

    # ---- input projection for every time step of this direction (one matmul) ----
    xg_scr[...] = (jnp.dot(x_ref[...], wih_ref[0],
                           preferred_element_type=jnp.float32) + bias_ref[0])

    whh = whh_ref[0]                          # (H, 4H)

    # ---- sequential recurrence over time ----
    def step(s, carry):
        h, c = carry
        t = d * (T - 1) + (1 - 2 * d) * s     # s for forward, T-1-s for backward
        row = t * B
        g = xg_scr[pl.ds(row, B)] + jnp.dot(h, whh,
                                            preferred_element_type=jnp.float32)
        i = _sigmoid(g[:, 0 * H:1 * H])
        f = _sigmoid(g[:, 1 * H:2 * H])
        gg = jnp.tanh(g[:, 2 * H:3 * H])
        o = _sigmoid(g[:, 3 * H:4 * H])
        c = f * c + i * gg
        h = o * jnp.tanh(c)
        rec_scr[pl.ds(row, B)] = h
        return h, c

    zeros = jnp.zeros((B, H), jnp.float32)
    lax.fori_loop(0, T, step, (zeros, zeros), unroll=True)

    # ---- this direction's half of the output Linear, as a single matmul ----
    proj = jnp.dot(rec_scr[...], wout_ref[0], preferred_element_type=jnp.float32)

    @pl.when(d == 0)
    def _():
        acc_scr[...] = proj + bout_ref[...]

    @pl.when(d == pl.num_programs(0) - 1)
    def _():
        out_ref[...] = (acc_scr[...] + proj).astype(out_ref.dtype)


def bidirectional_lstm(x, params):
    """x: (T, B, num_features) f32. params: kernel-layout dict (see pack_params)."""
    T, B, F = x.shape
    H = params["whh"].shape[1]
    O = params["wout"].shape[2]

    kernel = functools.partial(_bilstm_kernel, T, B, F, H, O)

    x2d = x.reshape(T * B, F).astype(jnp.float32)

    gate_flops = 2 * 2 * T * B * (F + H) * 4 * H     # both directions, mul+add
    proj_flops = 2 * 2 * T * B * H * O
    bytes_accessed = 4 * (T * B * F + params["wih"].size + params["whh"].size +
                          params["bias"].size + params["wout"].size +
                          params["bout"].size + T * B * O)

    out2d = pl.pallas_call(
        kernel,
        out_shape=jax.ShapeDtypeStruct((T * B, O), jnp.float32),
        grid=(2,),
        in_specs=[
            pl.BlockSpec((T * B, F), lambda d: (0, 0)),         # x, shared by both dirs
            pl.BlockSpec((1, F, 4 * H), lambda d: (d, 0, 0)),   # W_ih^T per direction
            pl.BlockSpec((1, H, 4 * H), lambda d: (d, 0, 0)),   # W_hh^T per direction
            pl.BlockSpec((1, 1, 4 * H), lambda d: (d, 0, 0)),   # folded b_ih + b_hh
            pl.BlockSpec((1, H, O), lambda d: (d, 0, 0)),       # half of W_out^T
            pl.BlockSpec((1, O), lambda d: (0, 0)),             # Linear bias
        ],
        out_specs=pl.BlockSpec((T * B, O), lambda d: (0, 0)),
        scratch_shapes=[pltpu.VMEM((T * B, 4 * H), jnp.float32),  # gate pre-activations
                        pltpu.VMEM((T * B, H), jnp.float32),      # this dir's hidden states
                        pltpu.VMEM((T * B, O), jnp.float32)],     # output accumulator
        compiler_params=pltpu.CompilerParams(
            # direction axis carries the output accumulator -> must be arbitrary
            dimension_semantics=("arbitrary",)),
        cost_estimate=pl.CostEstimate(flops=gate_flops + proj_flops,
                                      transcendentals=2 * T * B * 5 * H,
                                      bytes_accessed=bytes_accessed),
    )(x2d, params["wih"], params["whh"], params["bias"],
      params["wout"], params["bout"])

    return out2d.reshape(T, B, O)


# ----------------------------- parameters & reference -----------------------------

def make_params(key, num_features, hidden, output_size):
    """PyTorch-layout weights (gate order i, f, g, o), deterministic."""
    ks = jax.random.split(key, 10)
    s = 1.0 / float(hidden) ** 0.5

    def u(k, shape):
        return jax.random.uniform(k, shape, jnp.float32, -s, s)

    return {
        "w_ih": jnp.stack([u(ks[0], (4 * hidden, num_features)),
                           u(ks[1], (4 * hidden, num_features))]),
        "w_hh": jnp.stack([u(ks[2], (4 * hidden, hidden)),
                           u(ks[3], (4 * hidden, hidden))]),
        "b_ih": jnp.stack([u(ks[4], (4 * hidden,)), u(ks[5], (4 * hidden,))]),
        "b_hh": jnp.stack([u(ks[6], (4 * hidden,)), u(ks[7], (4 * hidden,))]),
        "w_out": u(ks[8], (output_size, 2 * hidden)),
        "b_out": u(ks[9], (output_size,)),
    }


def pack_params(pt):
    """Fold biases and pre-transpose weights into the kernel layout."""
    H = pt["w_hh"].shape[2]
    O = pt["w_out"].shape[0]
    return {
        "wih": jnp.transpose(pt["w_ih"], (0, 2, 1)),            # (2, F, 4H)
        "whh": jnp.transpose(pt["w_hh"], (0, 2, 1)),            # (2, H, 4H)
        "bias": (pt["b_ih"] + pt["b_hh"])[:, None, :],          # (2, 1, 4H)
        "wout": jnp.stack([pt["w_out"][:, :H].T,                # (2, H, O)
                           pt["w_out"][:, H:].T]),
        "bout": pt["b_out"].reshape(1, O),                      # (1, O)
    }


def ref_forward(x, pt):
    """Pure-JAX reference matching PyTorch nn.LSTM(bidirectional=True) + Linear."""
    T, B, _ = x.shape
    H = pt["w_hh"].shape[2]

    def run_dir(d, xs):
        w_ih, w_hh = pt["w_ih"][d], pt["w_hh"][d]
        b = pt["b_ih"][d] + pt["b_hh"][d]

        def step(carry, x_t):
            h, c = carry
            g = x_t @ w_ih.T + h @ w_hh.T + b
            i, f, gg, o = jnp.split(g, 4, axis=-1)
            i, f, o = _sigmoid(i), _sigmoid(f), _sigmoid(o)
            gg = jnp.tanh(gg)
            c = f * c + i * gg
            h = o * jnp.tanh(c)
            return (h, c), h

        init = (jnp.zeros((B, H), jnp.float32), jnp.zeros((B, H), jnp.float32))
        _, hs = lax.scan(step, init, xs)
        return hs

    h_fwd = run_dir(0, x)
    h_bwd = run_dir(1, x[::-1])[::-1]
    rec = jnp.concatenate([h_fwd, h_bwd], axis=-1)              # (T, B, 2H)
    out = rec.reshape(T * B, 2 * H) @ pt["w_out"].T + pt["b_out"]
    return out.reshape(T, B, -1)


if __name__ == "__main__":
    key = jax.random.PRNGKey(0)
    kx, kp = jax.random.split(key)

    T, B, F, H, O = 8, 2, 32, 32, 32        # seq=8, batch=2, features=32, hidden=32
    x = jax.random.normal(kx, (T, B, F), jnp.float32)
    pt_params = make_params(kp, F, H, O)
    k_params = pack_params(pt_params)

    out = bidirectional_lstm(x, k_params)
    out = jax.block_until_ready(out)

    ref = ref_forward(x, pt_params)
    assert out.shape == (T, B, O)
    if not bool(jnp.allclose(out, ref, atol=5e-3, rtol=5e-3)):
        raise SystemExit("Pallas kernel mismatch vs JAX reference")

    print("KERNEL_OK")
</pallas_src>

<mosaic_0001>
module attributes {stable_mosaic.version = 11 : i64} {
  func.func @_bilstm_kernel(%arg0: i32, %arg1: memref<16x32xf32, #tpu.memory_space<vmem>>, %arg2: memref<1x32x128xf32, #tpu.memory_space<vmem>>, %arg3: memref<1x32x128xf32, #tpu.memory_space<vmem>>, %arg4: memref<1x1x128xf32, #tpu.memory_space<vmem>>, %arg5: memref<1x32x32xf32, #tpu.memory_space<vmem>>, %arg6: memref<1x32xf32, #tpu.memory_space<vmem>>, %arg7: memref<16x32xf32, #tpu.memory_space<vmem>>, %arg8: memref<16x128xf32, #tpu.memory_space<vmem>>, %arg9: memref<16x32xf32, #tpu.memory_space<vmem>>, %arg10: memref<16x32xf32, #tpu.memory_space<vmem>>) attributes {dimension_semantics = [#tpu.dimension_semantics<arbitrary>], iteration_bounds = array<i64: 2>, scalar_prefetch = 0 : i64, scratch_operands = 3 : i64, tpu.core_type = #tpu.core_type<tc>, window_params = [{pipeline_mode = #tpu.pipeline_mode<synchronous>, transform_indices = @transform_0, window_bounds = array<i64: 16, 32>}, {transform_indices = @transform_1, window_bounds = array<i64: 1, 32, 128>}, {transform_indices = @transform_2, window_bounds = array<i64: 1, 32, 128>}, {transform_indices = @transform_3, window_bounds = array<i64: 1, 1, 128>}, {transform_indices = @transform_4, window_bounds = array<i64: 1, 32, 32>}, {pipeline_mode = #tpu.pipeline_mode<synchronous>, transform_indices = @transform_5, window_bounds = array<i64: 1, 32>}, {pipeline_mode = #tpu.pipeline_mode<synchronous>, transform_indices = @transform_6, window_bounds = array<i64: 16, 32>}]} {
    %c0 = arith.constant 0 : index
    %c0_0 = arith.constant 0 : index
    %0 = vector.load %arg1[%c0, %c0_0] : memref<16x32xf32, #tpu.memory_space<vmem>>, vector<16x32xf32>
    %c0_1 = arith.constant 0 : index
    %c0_2 = arith.constant 0 : index
    %c0_3 = arith.constant 0 : index
    %1 = vector.load %arg2[%c0_1, %c0_2, %c0_3] : memref<1x32x128xf32, #tpu.memory_space<vmem>>, vector<1x32x128xf32>
    %2 = vector.shape_cast %1 : vector<1x32x128xf32> to vector<32x128xf32>
    %cst = arith.constant dense<0.000000e+00> : vector<16x128xf32>
    %3 = tpu.matmul %0, %2, %cst {dimension_numbers = #tpu.dot_dimension_numbers<[1], [0], [0], [1], [0, 0, 1, 1], [], []>} : vector<16x32xf32>, vector<32x128xf32>, vector<16x128xf32> -> vector<16x128xf32>
    %c0_4 = arith.constant 0 : index
    %c0_5 = arith.constant 0 : index
    %c0_6 = arith.constant 0 : index
    %4 = vector.load %arg4[%c0_4, %c0_5, %c0_6] : memref<1x1x128xf32, #tpu.memory_space<vmem>>, vector<1x1x128xf32>
    %5 = vector.shape_cast %4 : vector<1x1x128xf32> to vector<1x128xf32>
    %6 = vector.broadcast %5 : vector<1x128xf32> to vector<16x128xf32>
    %7 = arith.addf %3, %6 : vector<16x128xf32>
    %c0_7 = arith.constant 0 : index
    %c0_8 = arith.constant 0 : index
    %8 = vector.load %arg8[%c0_7, %c0_8] : memref<16x128xf32, #tpu.memory_space<vmem>>, vector<16x128xf32>
    tpu.vector_store %arg8[%c0_7, %c0_8], %7 {strides = array<i32>} : memref<16x128xf32, #tpu.memory_space<vmem>>, vector<16x128xf32>,
    %c0_9 = arith.constant 0 : index
    %c0_10 = arith.constant 0 : index
    %c0_11 = arith.constant 0 : index
    %9 = vector.load %arg3[%c0_9, %c0_10, %c0_11] : memref<1x32x128xf32, #tpu.memory_space<vmem>>, vector<1x32x128xf32>
    %10 = vector.shape_cast %9 : vector<1x32x128xf32> to vector<32x128xf32>
    %cst_12 = arith.constant 0.000000e+00 : f32
    %11 = vector.broadcast %cst_12 : f32 to vector<2x32xf32>
    %c0_i32 = arith.constant 0 : i32
    %c7_i32 = arith.constant 7 : i32
    %12 = arith.muli %arg0, %c7_i32 : i32
    %c2_i32 = arith.constant 2 : i32
    %13 = arith.muli %c2_i32, %arg0 : i32
    %c1_i32 = arith.constant 1 : i32
    %14 = arith.subi %c1_i32, %13 : i32
    %15 = arith.muli %14, %c0_i32 : i32
    %16 = arith.addi %12, %15 : i32
    %c2_i32_13 = arith.constant 2 : i32
    %17 = arith.muli %16, %c2_i32_13 : i32
    %18 = arith.index_cast %17 : i32 to index
    %c0_14 = arith.constant 0 : index
    %19 = vector.load %arg8[%18, %c0_14] : memref<16x128xf32, #tpu.memory_space<vmem>>, vector<2x128xf32>
    %cst_15 = arith.constant dense<0.000000e+00> : vector<2x128xf32>
    %20 = tpu.matmul %11, %10, %cst_15 {dimension_numbers = #tpu.dot_dimension_numbers<[1], [0], [0], [1], [0, 0, 1, 1], [], []>} : vector<2x32xf32>, vector<32x128xf32>, vector<2x128xf32> -> vector<2x128xf32>
    %21 = arith.addf %19, %20 : vector<2x128xf32>
    %22 = vector.extract_strided_slice %21 {offsets = [0, 0], sizes = [2, 32], strides = [1, 1]} : vector<2x128xf32> to vector<2x32xf32>
    %cst_16 = arith.constant 0.000000e+00 : f32
    %23 = vector.broadcast %cst_16 : f32 to vector<2x32xf32>
    %24 = arith.subf %23, %22 : vector<2x32xf32>
    %25 = math.exp %24 : vector<2x32xf32>
    %cst_17 = arith.constant 1.000000e+00 : f32
    %26 = vector.broadcast %cst_17 : f32 to vector<2x32xf32>
    %27 = arith.addf %26, %25 : vector<2x32xf32>
    %cst_18 = arith.constant 1.000000e+00 : f32
    %28 = vector.broadcast %cst_18 : f32 to vector<2x32xf32>
    %29 = arith.divf %28, %27 : vector<2x32xf32>
    %30 = vector.extract_strided_slice %21 {offsets = [0, 32], sizes = [2, 32], strides = [1, 1]} : vector<2x128xf32> to vector<2x32xf32>
    %cst_19 = arith.constant 0.000000e+00 : f32
    %31 = vector.broadcast %cst_19 : f32 to vector<2x32xf32>
    %32 = arith.subf %31, %30 : vector<2x32xf32>
    %33 = math.exp %32 : vector<2x32xf32>
    %cst_20 = arith.constant 1.000000e+00 : f32
    %34 = vector.broadcast %cst_20 : f32 to vector<2x32xf32>
    %35 = arith.addf %34, %33 : vector<2x32xf32>
    %cst_21 = arith.constant 1.000000e+00 : f32
    %36 = vector.broadcast %cst_21 : f32 to vector<2x32xf32>
    %37 = arith.divf %36, %35 : vector<2x32xf32>
    %38 = vector.extract_strided_slice %21 {offsets = [0, 64], sizes = [2, 32], strides = [1, 1]} : vector<2x128xf32> to vector<2x32xf32>
    %39 = math.tanh %38 : vector<2x32xf32>
    %40 = vector.extract_strided_slice %21 {offsets = [0, 96], sizes = [2, 32], strides = [1, 1]} : vector<2x128xf32> to vector<2x32xf32>
    %cst_22 = arith.constant 0.000000e+00 : f32
    %41 = vector.broadcast %cst_22 : f32 to vector<2x32xf32>
    %42 = arith.subf %41, %40 : vector<2x32xf32>
    %43 = math.exp %42 : vector<2x32xf32>
    %cst_23 = arith.constant 1.000000e+00 : f32
    %44 = vector.broadcast %cst_23 : f32 to vector<2x32xf32>
    %45 = arith.addf %44, %43 : vector<2x32xf32>
    %cst_24 = arith.constant 1.000000e+00 : f32
    %46 = vector.broadcast %cst_24 : f32 to vector<2x32xf32>
    %47 = arith.divf %46, %45 : vector<2x32xf32>
    %48 = arith.mulf %37, %11 : vector<2x32xf32>
    %49 = arith.mulf %29, %39 : vector<2x32xf32>
    %50 = arith.addf %48, %49 : vector<2x32xf32>
    %51 = math.tanh %50 : vector<2x32xf32>
    %52 = arith.mulf %47, %51 : vector<2x32xf32>
    %53 = arith.index_cast %17 : i32 to index
    %c0_25 = arith.constant 0 : index
    %54 = vector.load %arg9[%53, %c0_25] : memref<16x32xf32, #tpu.memory_space<vmem>>, vector<2x32xf32>
    tpu.vector_store %arg9[%53, %c0_25], %52 {strides = array<i32>} : memref<16x32xf32, #tpu.memory_space<vmem>>, vector<2x32xf32>,
    %c1_i32_26 = arith.constant 1 : i32
    %c7_i32_27 = arith.constant 7 : i32
    %55 = arith.muli %arg0, %c7_i32_27 : i32
    %c2_i32_28 = arith.constant 2 : i32
    %56 = arith.muli %c2_i32_28, %arg0 : i32
    %c1_i32_29 = arith.constant 1 : i32
    %57 = arith.subi %c1_i32_29, %56 : i32
    %58 = arith.muli %57, %c1_i32_26 : i32
    %59 = arith.addi %55, %58 : i32
    %c2_i32_30 = arith.constant 2 : i32
    %60 = arith.muli %59, %c2_i32_30 : i32
    %61 = arith.index_cast %60 : i32 to index
    %c0_31 = arith.constant 0 : index
    %62 = vector.load %arg8[%61, %c0_31] : memref<16x128xf32, #tpu.memory_space<vmem>>, vector<2x128xf32>
    %cst_32 = arith.constant dense<0.000000e+00> : vector<2x128xf32>
    %63 = tpu.matmul %52, %10, %cst_32 {dimension_numbers = #tpu.dot_dimension_numbers<[1], [0], [0], [1], [0, 0, 1, 1], [], []>} : vector<2x32xf32>, vector<32x128xf32>, vector<2x128xf32> -> vector<2x128xf32>
    %64 = arith.addf %62, %63 : vector<2x128xf32>
    %65 = vector.extract_strided_slice %64 {offsets = [0, 0], sizes = [2, 32], strides = [1, 1]} : vector<2x128xf32> to vector<2x32xf32>
    %cst_33 = arith.constant 0.000000e+00 : f32
    %66 = vector.broadcast %cst_33 : f32 to vector<2x32xf32>
    %67 = arith.subf %66, %65 : vector<2x32xf32>
    %68 = math.exp %67 : vector<2x32xf32>
    %cst_34 = arith.constant 1.000000e+00 : f32
    %69 = vector.broadcast %cst_34 : f32 to vector<2x32xf32>
    %70 = arith.addf %69, %68 : vector<2x32xf32>
    %cst_35 = arith.constant 1.000000e+00 : f32
    %71 = vector.broadcast %cst_35 : f32 to vector<2x32xf32>
    %72 = arith.divf %71, %70 : vector<2x32xf32>
    %73 = vector.extract_strided_slice %64 {offsets = [0, 32], sizes = [2, 32], strides = [1, 1]} : vector<2x128xf32> to vector<2x32xf32>
    %cst_36 = arith.constant 0.000000e+00 : f32
    %74 = vector.broadcast %cst_36 : f32 to vector<2x32xf32>
    %75 = arith.subf %74, %73 : vector<2x32xf32>
    %76 = math.exp %75 : vector<2x32xf32>
    %cst_37 = arith.constant 1.000000e+00 : f32
    %77 = vector.broadcast %cst_37 : f32 to vector<2x32xf32>
    %78 = arith.addf %77, %76 : vector<2x32xf32>
    %cst_38 = arith.constant 1.000000e+00 : f32
    %79 = vector.broadcast %cst_38 : f32 to vector<2x32xf32>
    %80 = arith.divf %79, %78 : vector<2x32xf32>
    %81 = vector.extract_strided_slice %64 {offsets = [0, 64], sizes = [2, 32], strides = [1, 1]} : vector<2x128xf32> to vector<2x32xf32>
    %82 = math.tanh %81 : vector<2x32xf32>
    %83 = vector.extract_strided_slice %64 {offsets = [0, 96], sizes = [2, 32], strides = [1, 1]} : vector<2x128xf32> to vector<2x32xf32>
    %cst_39 = arith.constant 0.000000e+00 : f32
    %84 = vector.broadcast %cst_39 : f32 to vector<2x32xf32>
    %85 = arith.subf %84, %83 : vector<2x32xf32>
    %86 = math.exp %85 : vector<2x32xf32>
    %cst_40 = arith.constant 1.000000e+00 : f32
    %87 = vector.broadcast %cst_40 : f32 to vector<2x32xf32>
    %88 = arith.addf %87, %86 : vector<2x32xf32>
    %cst_41 = arith.constant 1.000000e+00 : f32
    %89 = vector.broadcast %cst_41 : f32 to vector<2x32xf32>
    %90 = arith.divf %89, %88 : vector<2x32xf32>
    %91 = arith.mulf %80, %50 : vector<2x32xf32>
    %92 = arith.mulf %72, %82 : vector<2x32xf32>
    %93 = arith.addf %91, %92 : vector<2x32xf32>
    %94 = math.tanh %93 : vector<2x32xf32>
    %95 = arith.mulf %90, %94 : vector<2x32xf32>
    %96 = arith.index_cast %60 : i32 to index
    %c0_42 = arith.constant 0 : index
    %97 = vector.load %arg9[%96, %c0_42] : memref<16x32xf32, #tpu.memory_space<vmem>>, vector<2x32xf32>
    tpu.vector_store %arg9[%96, %c0_42], %95 {strides = array<i32>} : memref<16x32xf32, #tpu.memory_space<vmem>>, vector<2x32xf32>,
    %c2_i32_43 = arith.constant 2 : i32
    %c7_i32_44 = arith.constant 7 : i32
    %98 = arith.muli %arg0, %c7_i32_44 : i32
    %c2_i32_45 = arith.constant 2 : i32
    %99 = arith.muli %c2_i32_45, %arg0 : i32
    %c1_i32_46 = arith.constant 1 : i32
    %100 = arith.subi %c1_i32_46, %99 : i32
    %101 = arith.muli %100, %c2_i32_43 : i32
    %102 = arith.addi %98, %101 : i32
    %c2_i32_47 = arith.constant 2 : i32
    %103 = arith.muli %102, %c2_i32_47 : i32
    %104 = arith.index_cast %103 : i32 to index
    %c0_48 = arith.constant 0 : index
    %105 = vector.load %arg8[%104, %c0_48] : memref<16x128xf32, #tpu.memory_space<vmem>>, vector<2x128xf32>
    %cst_49 = arith.constant dense<0.000000e+00> : vector<2x128xf32>
    %106 = tpu.matmul %95, %10, %cst_49 {dimension_numbers = #tpu.dot_dimension_numbers<[1], [0], [0], [1], [0, 0, 1, 1], [], []>} : vector<2x32xf32>, vector<32x128xf32>, vector<2x128xf32> -> vector<2x128xf32>
    %107 = arith.addf %105, %106 : vector<2x128xf32>
    %108 = vector.extract_strided_slice %107 {offsets = [0, 0], sizes = [2, 32], strides = [1, 1]} : vector<2x128xf32> to vector<2x32xf32>
    %cst_50 = arith.constant 0.000000e+00 : f32
    %109 = vector.broadcast %cst_50 : f32 to vector<2x32xf32>
    %110 = arith.subf %109, %108 : vector<2x32xf32>
    %111 = math.exp %110 : vector<2x32xf32>
    %cst_51 = arith.constant 1.000000e+00 : f32
    %112 = vector.broadcast %cst_51 : f32 to vector<2x32xf32>
    %113 = arith.addf %112, %111 : vector<2x32xf32>
    %cst_52 = arith.constant 1.000000e+00 : f32
    %114 = vector.broadcast %cst_52 : f32 to vector<2x32xf32>
    %115 = arith.divf %114, %113 : vector<2x32xf32>
    %116 = vector.extract_strided_slice %107 {offsets = [0, 32], sizes = [2, 32], strides = [1, 1]} : vector<2x128xf32> to vector<2x32xf32>
    %cst_53 = arith.constant 0.000000e+00 : f32
    %117 = vector.broadcast %cst_53 : f32 to vector<2x32xf32>
    %118 = arith.subf %117, %116 : vector<2x32xf32>
    %119 = math.exp %118 : vector<2x32xf32>
    %cst_54 = arith.constant 1.000000e+00 : f32
    %120 = vector.broadcast %cst_54 : f32 to vector<2x32xf32>
    %121 = arith.addf %120, %119 : vector<2x32xf32>
    %cst_55 = arith.constant 1.000000e+00 : f32
    %122 = vector.broadcast %cst_55 : f32 to vector<2x32xf32>
    %123 = arith.divf %122, %121 : vector<2x32xf32>
    %124 = vector.extract_strided_slice %107 {offsets = [0, 64], sizes = [2, 32], strides = [1, 1]} : vector<2x128xf32> to vector<2x32xf32>
    %125 = math.tanh %124 : vector<2x32xf32>
    %126 = vector.extract_strided_slice %107 {offsets = [0, 96], sizes = [2, 32], strides = [1, 1]} : vector<2x128xf32> to vector<2x32xf32>
    %cst_56 = arith.constant 0.000000e+00 : f32
    %127 = vector.broadcast %cst_56 : f32 to vector<2x32xf32>
    %128 = arith.subf %127, %126 : vector<2x32xf32>
    %129 = math.exp %128 : vector<2x32xf32>
    %cst_57 = arith.constant 1.000000e+00 : f32
    %130 = vector.broadcast %cst_57 : f32 to vector<2x32xf32>
    %131 = arith.addf %130, %129 : vector<2x32xf32>
    %cst_58 = arith.constant 1.000000e+00 : f32
    %132 = vector.broadcast %cst_58 : f32 to vector<2x32xf32>
    %133 = arith.divf %132, %131 : vector<2x32xf32>
    %134 = arith.mulf %123, %93 : vector<2x32xf32>
    %135 = arith.mulf %115, %125 : vector<2x32xf32>
    %136 = arith.addf %134, %135 : vector<2x32xf32>
    %137 = math.tanh %136 : vector<2x32xf32>
    %138 = arith.mulf %133, %137 : vector<2x32xf32>
    %139 = arith.index_cast %103 : i32 to index
    %c0_59 = arith.constant 0 : index
    %140 = vector.load %arg9[%139, %c0_59] : memref<16x32xf32, #tpu.memory_space<vmem>>, vector<2x32xf32>
    tpu.vector_store %arg9[%139, %c0_59], %138 {strides = array<i32>} : memref<16x32xf32, #tpu.memory_space<vmem>>, vector<2x32xf32>,
    %c3_i32 = arith.constant 3 : i32
    %c7_i32_60 = arith.constant 7 : i32
    %141 = arith.muli %arg0, %c7_i32_60 : i32
    %c2_i32_61 = arith.constant 2 : i32
    %142 = arith.muli %c2_i32_61, %arg0 : i32
    %c1_i32_62 = arith.constant 1 : i32
    %143 = arith.subi %c1_i32_62, %142 : i32
    %144 = arith.muli %143, %c3_i32 : i32
    %145 = arith.addi %141, %144 : i32
    %c2_i32_63 = arith.constant 2 : i32
    %146 = arith.muli %145, %c2_i32_63 : i32
    %147 = arith.index_cast %146 : i32 to index
    %c0_64 = arith.constant 0 : index
    %148 = vector.load %arg8[%147, %c0_64] : memref<16x128xf32, #tpu.memory_space<vmem>>, vector<2x128xf32>
    %cst_65 = arith.constant dense<0.000000e+00> : vector<2x128xf32>
    %149 = tpu.matmul %138, %10, %cst_65 {dimension_numbers = #tpu.dot_dimension_numbers<[1], [0], [0], [1], [0, 0, 1, 1], [], []>} : vector<2x32xf32>, vector<32x128xf32>, vector<2x128xf32> -> vector<2x128xf32>
    %150 = arith.addf %148, %149 : vector<2x128xf32>
    %151 = vector.extract_strided_slice %150 {offsets = [0, 0], sizes = [2, 32], strides = [1, 1]} : vector<2x128xf32> to vector<2x32xf32>
    %cst_66 = arith.constant 0.000000e+00 : f32
    %152 = vector.broadcast %cst_66 : f32 to vector<2x32xf32>
    %153 = arith.subf %152, %151 : vector<2x32xf32>
    %154 = math.exp %153 : vector<2x32xf32>
    %cst_67 = arith.constant 1.000000e+00 : f32
    %155 = vector.broadcast %cst_67 : f32 to vector<2x32xf32>
    %156 = arith.addf %155, %154 : vector<2x32xf32>
    %cst_68 = arith.constant 1.000000e+00 : f32
    %157 = vector.broadcast %cst_68 : f32 to vector<2x32xf32>
    %158 = arith.divf %157, %156 : vector<2x32xf32>
    %159 = vector.extract_strided_slice %150 {offsets = [0, 32], sizes = [2, 32], strides = [1, 1]} : vector<2x128xf32> to vector<2x32xf32>
    %cst_69 = arith.constant 0.000000e+00 : f32
    %160 = vector.broadcast %cst_69 : f32 to vector<2x32xf32>
    %161 = arith.subf %160, %159 : vector<2x32xf32>
    %162 = math.exp %161 : vector<2x32xf32>
    %cst_70 = arith.constant 1.000000e+00 : f32
    %163 = vector.broadcast %cst_70 : f32 to vector<2x32xf32>
    %164 = arith.addf %163, %162 : vector<2x32xf32>
    %cst_71 = arith.constant 1.000000e+00 : f32
    %165 = vector.broadcast %cst_71 : f32 to vector<2x32xf32>
    %166 = arith.divf %165, %164 : vector<2x32xf32>
    %167 = vector.extract_strided_slice %150 {offsets = [0, 64], sizes = [2, 32], strides = [1, 1]} : vector<2x128xf32> to vector<2x32xf32>
    %168 = math.tanh %167 : vector<2x32xf32>
    %169 = vector.extract_strided_slice %150 {offsets = [0, 96], sizes = [2, 32], strides = [1, 1]} : vector<2x128xf32> to vector<2x32xf32>
    %cst_72 = arith.constant 0.000000e+00 : f32
    %170 = vector.broadcast %cst_72 : f32 to vector<2x32xf32>
    %171 = arith.subf %170, %169 : vector<2x32xf32>
    %172 = math.exp %171 : vector<2x32xf32>
    %cst_73 = arith.constant 1.000000e+00 : f32
    %173 = vector.broadcast %cst_73 : f32 to vector<2x32xf32>
    %174 = arith.addf %173, %172 : vector<2x32xf32>
    %cst_74 = arith.constant 1.000000e+00 : f32
    %175 = vector.broadcast %cst_74 : f32 to vector<2x32xf32>
    %176 = arith.divf %175, %174 : vector<2x32xf32>
    %177 = arith.mulf %166, %136 : vector<2x32xf32>
    %178 = arith.mulf %158, %168 : vector<2x32xf32>
    %179 = arith.addf %177, %178 : vector<2x32xf32>
    %180 = math.tanh %179 : vector<2x32xf32>
    %181 = arith.mulf %176, %180 : vector<2x32xf32>
    %182 = arith.index_cast %146 : i32 to index
    %c0_75 = arith.constant 0 : index
    %183 = vector.load %arg9[%182, %c0_75] : memref<16x32xf32, #tpu.memory_space<vmem>>, vector<2x32xf32>
    tpu.vector_store %arg9[%182, %c0_75], %181 {strides = array<i32>} : memref<16x32xf32, #tpu.memory_space<vmem>>, vector<2x32xf32>,
    %c4_i32 = arith.constant 4 : i32
    %c7_i32_76 = arith.constant 7 : i32
    %184 = arith.muli %arg0, %c7_i32_76 : i32
    %c2_i32_77 = arith.constant 2 : i32
    %185 = arith.muli %c2_i32_77, %arg0 : i32
    %c1_i32_78 = arith.constant 1 : i32
    %186 = arith.subi %c1_i32_78, %185 : i32
    %187 = arith.muli %186, %c4_i32 : i32
    %188 = arith.addi %184, %187 : i32
    %c2_i32_79 = arith.constant 2 : i32
    %189 = arith.muli %188, %c2_i32_79 : i32
    %190 = arith.index_cast %189 : i32 to index
    %c0_80 = arith.constant 0 : index
    %191 = vector.load %arg8[%190, %c0_80] : memref<16x128xf32, #tpu.memory_space<vmem>>, vector<2x128xf32>
    %cst_81 = arith.constant dense<0.000000e+00> : vector<2x128xf32>
    %192 = tpu.matmul %181, %10, %cst_81 {dimension_numbers = #tpu.dot_dimension_numbers<[1], [0], [0], [1], [0, 0, 1, 1], [], []>} : vector<2x32xf32>, vector<32x128xf32>, vector<2x128xf32> -> vector<2x128xf32>
    %193 = arith.addf %191, %192 : vector<2x128xf32>
    %194 = vector.extract_strided_slice %193 {offsets = [0, 0], sizes = [2, 32], strides = [1, 1]} : vector<2x128xf32> to vector<2x32xf32>
    %cst_82 = arith.constant 0.000000e+00 : f32
    %195 = vector.broadcast %cst_82 : f32 to vector<2x32xf32>
    %196 = arith.subf %195, %194 : vector<2x32xf32>
    %197 = math.exp %196 : vector<2x32xf32>
    %cst_83 = arith.constant 1.000000e+00 : f32
    %198 = vector.broadcast %cst_83 : f32 to vector<2x32xf32>
    %199 = arith.addf %198, %197 : vector<2x32xf32>
    %cst_84 = arith.constant 1.000000e+00 : f32
    %200 = vector.broadcast %cst_84 : f32 to vector<2x32xf32>
    %201 = arith.divf %200, %199 : vector<2x32xf32>
    %202 = vector.extract_strided_slice %193 {offsets = [0, 32], sizes = [2, 32], strides = [1, 1]} : vector<2x128xf32> to vector<2x32xf32>
    %cst_85 = arith.constant 0.000000e+00 : f32
    %203 = vector.broadcast %cst_85 : f32 to vector<2x32xf32>
    %204 = arith.subf %203, %202 : vector<2x32xf32>
    %205 = math.exp %204 : vector<2x32xf32>
    %cst_86 = arith.constant 1.000000e+00 : f32
    %206 = vector.broadcast %cst_86 : f32 to vector<2x32xf32>
    %207 = arith.addf %206, %205 : vector<2x32xf32>
    %cst_87 = arith.constant 1.000000e+00 : f32
    %208 = vector.broadcast %cst_87 : f32 to vector<2x32xf32>
    %209 = arith.divf %208, %207 : vector<2x32xf32>
    %210 = vector.extract_strided_slice %193 {offsets = [0, 64], sizes = [2, 32], strides = [1, 1]} : vector<2x128xf32> to vector<2x32xf32>
    %211 = math.tanh %210 : vector<2x32xf32>
    %212 = vector.extract_strided_slice %193 {offsets = [0, 96], sizes = [2, 32], strides = [1, 1]} : vector<2x128xf32> to vector<2x32xf32>
    %cst_88 = arith.constant 0.000000e+00 : f32
    %213 = vector.broadcast %cst_88 : f32 to vector<2x32xf32>
    %214 = arith.subf %213, %212 : vector<2x32xf32>
    %215 = math.exp %214 : vector<2x32xf32>
    %cst_89 = arith.constant 1.000000e+00 : f32
    %216 = vector.broadcast %cst_89 : f32 to vector<2x32xf32>
    %217 = arith.addf %216, %215 : vector<2x32xf32>
    %cst_90 = arith.constant 1.000000e+00 : f32
    %218 = vector.broadcast %cst_90 : f32 to vector<2x32xf32>
    %219 = arith.divf %218, %217 : vector<2x32xf32>
    %220 = arith.mulf %209, %179 : vector<2x32xf32>
    %221 = arith.mulf %201, %211 : vector<2x32xf32>
    %222 = arith.addf %220, %221 : vector<2x32xf32>
    %223 = math.tanh %222 : vector<2x32xf32>
    %224 = arith.mulf %219, %223 : vector<2x32xf32>
    %225 = arith.index_cast %189 : i32 to index
    %c0_91 = arith.constant 0 : index
    %226 = vector.load %arg9[%225, %c0_91] : memref<16x32xf32, #tpu.memory_space<vmem>>, vector<2x32xf32>
    tpu.vector_store %arg9[%225, %c0_91], %224 {strides = array<i32>} : memref<16x32xf32, #tpu.memory_space<vmem>>, vector<2x32xf32>,
    %c5_i32 = arith.constant 5 : i32
    %c7_i32_92 = arith.constant 7 : i32
    %227 = arith.muli %arg0, %c7_i32_92 : i32
    %c2_i32_93 = arith.constant 2 : i32
    %228 = arith.muli %c2_i32_93, %arg0 : i32
    %c1_i32_94 = arith.constant 1 : i32
    %229 = arith.subi %c1_i32_94, %228 : i32
    %230 = arith.muli %229, %c5_i32 : i32
    %231 = arith.addi %227, %230 : i32
    %c2_i32_95 = arith.constant 2 : i32
    %232 = arith.muli %231, %c2_i32_95 : i32
    %233 = arith.index_cast %232 : i32 to index
    %c0_96 = arith.constant 0 : index
    %234 = vector.load %arg8[%233, %c0_96] : memref<16x128xf32, #tpu.memory_space<vmem>>, vector<2x128xf32>
    %cst_97 = arith.constant dense<0.000000e+00> : vector<2x128xf32>
    %235 = tpu.matmul %224, %10, %cst_97 {dimension_numbers = #tpu.dot_dimension_numbers<[1], [0], [0], [1], [0, 0, 1, 1], [], []>} : vector<2x32xf32>, vector<32x128xf32>, vector<2x128xf32> -> vector<2x128xf32>
    %236 = arith.addf %234, %235 : vector<2x128xf32>
    %237 = vector.extract_strided_slice %236 {offsets = [0, 0], sizes = [2, 32], strides = [1, 1]} : vector<2x128xf32> to vector<2x32xf32>
    %cst_98 = arith.constant 0.000000e+00 : f32
    %238 = vector.broadcast %cst_98 : f32 to vector<2x32xf32>
    %239 = arith.subf %238, %237 : vector<2x32xf32>
    %240 = math.exp %239 : vector<2x32xf32>
    %cst_99 = arith.constant 1.000000e+00 : f32
    %241 = vector.broadcast %cst_99 : f32 to vector<2x32xf32>
    %242 = arith.addf %241, %240 : vector<2x32xf32>
    %cst_100 = arith.constant 1.000000e+00 : f32
    %243 = vector.broadcast %cst_100 : f32 to vector<2x32xf32>
    %244 = arith.divf %243, %242 : vector<2x32xf32>
    %245 = vector.extract_strided_slice %236 {offsets = [0, 32], sizes = [2, 32], strides = [1, 1]} : vector<2x128xf32> to vector<2x32xf32>
    %cst_101 = arith.constant 0.000000e+00 : f32
    %246 = vector.broadcast %cst_101 : f32 to vector<2x32xf32>
    %247 = arith.subf %246, %245 : vector<2x32xf32>
    %248 = math.exp %247 : vector<2x32xf32>
    %cst_102 = arith.constant 1.000000e+00 : f32
    %249 = vector.broadcast %cst_102 : f32 to vector<2x32xf32>
    %250 = arith.addf %249, %248 : vector<2x32xf32>
    %cst_103 = arith.constant 1.000000e+00 : f32
    %251 = vector.broadcast %cst_103 : f32 to vector<2x32xf32>
    %252 = arith.divf %251, %250 : vector<2x32xf32>
    %253 = vector.extract_strided_slice %236 {offsets = [0, 64], sizes = [2, 32], strides = [1, 1]} : vector<2x128xf32> to vector<2x32xf32>
    %254 = math.tanh %253 : vector<2x32xf32>
    %255 = vector.extract_strided_slice %236 {offsets = [0, 96], sizes = [2, 32], strides = [1, 1]} : vector<2x128xf32> to vector<2x32xf32>
    %cst_104 = arith.constant 0.000000e+00 : f32
    %256 = vector.broadcast %cst_104 : f32 to vector<2x32xf32>
    %257 = arith.subf %256, %255 : vector<2x32xf32>
    %258 = math.exp %257 : vector<2x32xf32>
    %cst_105 = arith.constant 1.000000e+00 : f32
    %259 = vector.broadcast %cst_105 : f32 to vector<2x32xf32>
    %260 = arith.addf %259, %258 : vector<2x32xf32>
    %cst_106 = arith.constant 1.000000e+00 : f32
    %261 = vector.broadcast %cst_106 : f32 to vector<2x32xf32>
    %262 = arith.divf %261, %260 : vector<2x32xf32>
    %263 = arith.mulf %252, %222 : vector<2x32xf32>
    %264 = arith.mulf %244, %254 : vector<2x32xf32>
    %265 = arith.addf %263, %264 : vector<2x32xf32>
    %266 = math.tanh %265 : vector<2x32xf32>
    %267 = arith.mulf %262, %266 : vector<2x32xf32>
    %268 = arith.index_cast %232 : i32 to index
    %c0_107 = arith.constant 0 : index
    %269 = vector.load %arg9[%268, %c0_107] : memref<16x32xf32, #tpu.memory_space<vmem>>, vector<2x32xf32>
    tpu.vector_store %arg9[%268, %c0_107], %267 {strides = array<i32>} : memref<16x32xf32, #tpu.memory_space<vmem>>, vector<2x32xf32>,
    %c6_i32 = arith.constant 6 : i32
    %c7_i32_108 = arith.constant 7 : i32
    %270 = arith.muli %arg0, %c7_i32_108 : i32
    %c2_i32_109 = arith.constant 2 : i32
    %271 = arith.muli %c2_i32_109, %arg0 : i32
    %c1_i32_110 = arith.constant 1 : i32
    %272 = arith.subi %c1_i32_110, %271 : i32
    %273 = arith.muli %272, %c6_i32 : i32
    %274 = arith.addi %270, %273 : i32
    %c2_i32_111 = arith.constant 2 : i32
    %275 = arith.muli %274, %c2_i32_111 : i32
    %276 = arith.index_cast %275 : i32 to index
    %c0_112 = arith.constant 0 : index
    %277 = vector.load %arg8[%276, %c0_112] : memref<16x128xf32, #tpu.memory_space<vmem>>, vector<2x128xf32>
    %cst_113 = arith.constant dense<0.000000e+00> : vector<2x128xf32>
    %278 = tpu.matmul %267, %10, %cst_113 {dimension_numbers = #tpu.dot_dimension_numbers<[1], [0], [0], [1], [0, 0, 1, 1], [], []>} : vector<2x32xf32>, vector<32x128xf32>, vector<2x128xf32> -> vector<2x128xf32>
    %279 = arith.addf %277, %278 : vector<2x128xf32>
    %280 = vector.extract_strided_slice %279 {offsets = [0, 0], sizes = [2, 32], strides = [1, 1]} : vector<2x128xf32> to vector<2x32xf32>
    %cst_114 = arith.constant 0.000000e+00 : f32
    %281 = vector.broadcast %cst_114 : f32 to vector<2x32xf32>
    %282 = arith.subf %281, %280 : vector<2x32xf32>
    %283 = math.exp %282 : vector<2x32xf32>
    %cst_115 = arith.constant 1.000000e+00 : f32
    %284 = vector.broadcast %cst_115 : f32 to vector<2x32xf32>
    %285 = arith.addf %284, %283 : vector<2x32xf32>
    %cst_116 = arith.constant 1.000000e+00 : f32
    %286 = vector.broadcast %cst_116 : f32 to vector<2x32xf32>
    %287 = arith.divf %286, %285 : vector<2x32xf32>
    %288 = vector.extract_strided_slice %279 {offsets = [0, 32], sizes = [2, 32], strides = [1, 1]} : vector<2x128xf32> to vector<2x32xf32>
    %cst_117 = arith.constant 0.000000e+00 : f32
    %289 = vector.broadcast %cst_117 : f32 to vector<2x32xf32>
    %290 = arith.subf %289, %288 : vector<2x32xf32>
    %291 = math.exp %290 : vector<2x32xf32>
    %cst_118 = arith.constant 1.000000e+00 : f32
    %292 = vector.broadcast %cst_118 : f32 to vector<2x32xf32>
    %293 = arith.addf %292, %291 : vector<2x32xf32>
    %cst_119 = arith.constant 1.000000e+00 : f32
    %294 = vector.broadcast %cst_119 : f32 to vector<2x32xf32>
    %295 = arith.divf %294, %293 : vector<2x32xf32>
    %296 = vector.extract_strided_slice %279 {offsets = [0, 64], sizes = [2, 32], strides = [1, 1]} : vector<2x128xf32> to vector<2x32xf32>
    %297 = math.tanh %296 : vector<2x32xf32>
    %298 = vector.extract_strided_slice %279 {offsets = [0, 96], sizes = [2, 32], strides = [1, 1]} : vector<2x128xf32> to vector<2x32xf32>
    %cst_120 = arith.constant 0.000000e+00 : f32
    %299 = vector.broadcast %cst_120 : f32 to vector<2x32xf32>
    %300 = arith.subf %299, %298 : vector<2x32xf32>
    %301 = math.exp %300 : vector<2x32xf32>
    %cst_121 = arith.constant 1.000000e+00 : f32
    %302 = vector.broadcast %cst_121 : f32 to vector<2x32xf32>
    %303 = arith.addf %302, %301 : vector<2x32xf32>
    %cst_122 = arith.constant 1.000000e+00 : f32
    %304 = vector.broadcast %cst_122 : f32 to vector<2x32xf32>
    %305 = arith.divf %304, %303 : vector<2x32xf32>
    %306 = arith.mulf %295, %265 : vector<2x32xf32>
    %307 = arith.mulf %287, %297 : vector<2x32xf32>
    %308 = arith.addf %306, %307 : vector<2x32xf32>
    %309 = math.tanh %308 : vector<2x32xf32>
    %310 = arith.mulf %305, %309 : vector<2x32xf32>
    %311 = arith.index_cast %275 : i32 to index
    %c0_123 = arith.constant 0 : index
    %312 = vector.load %arg9[%311, %c0_123] : memref<16x32xf32, #tpu.memory_space<vmem>>, vector<2x32xf32>
    tpu.vector_store %arg9[%311, %c0_123], %310 {strides = array<i32>} : memref<16x32xf32, #tpu.memory_space<vmem>>, vector<2x32xf32>,
    %c7_i32_124 = arith.constant 7 : i32
    %c7_i32_125 = arith.constant 7 : i32
    %313 = arith.muli %arg0, %c7_i32_125 : i32
    %c2_i32_126 = arith.constant 2 : i32
    %314 = arith.muli %c2_i32_126, %arg0 : i32
    %c1_i32_127 = arith.constant 1 : i32
    %315 = arith.subi %c1_i32_127, %314 : i32
    %316 = arith.muli %315, %c7_i32_124 : i32
    %317 = arith.addi %313, %316 : i32
    %c2_i32_128 = arith.constant 2 : i32
    %318 = arith.muli %317, %c2_i32_128 : i32
    %319 = arith.index_cast %318 : i32 to index
    %c0_129 = arith.constant 0 : index
    %320 = vector.load %arg8[%319, %c0_129] : memref<16x128xf32, #tpu.memory_space<vmem>>, vector<2x128xf32>
    %cst_130 = arith.constant dense<0.000000e+00> : vector<2x128xf32>
    %321 = tpu.matmul %310, %10, %cst_130 {dimension_numbers = #tpu.dot_dimension_numbers<[1], [0], [0], [1], [0, 0, 1, 1], [], []>} : vector<2x32xf32>, vector<32x128xf32>, vector<2x128xf32> -> vector<2x128xf32>
    %322 = arith.addf %320, %321 : vector<2x128xf32>
    %323 = vector.extract_strided_slice %322 {offsets = [0, 0], sizes = [2, 32], strides = [1, 1]} : vector<2x128xf32> to vector<2x32xf32>
    %cst_131 = arith.constant 0.000000e+00 : f32
    %324 = vector.broadcast %cst_131 : f32 to vector<2x32xf32>
    %325 = arith.subf %324, %323 : vector<2x32xf32>
    %326 = math.exp %325 : vector<2x32xf32>
    %cst_132 = arith.constant 1.000000e+00 : f32
    %327 = vector.broadcast %cst_132 : f32 to vector<2x32xf32>
    %328 = arith.addf %327, %326 : vector<2x32xf32>
    %cst_133 = arith.constant 1.000000e+00 : f32
    %329 = vector.broadcast %cst_133 : f32 to vector<2x32xf32>
    %330 = arith.divf %329, %328 : vector<2x32xf32>
    %331 = vector.extract_strided_slice %322 {offsets = [0, 32], sizes = [2, 32], strides = [1, 1]} : vector<2x128xf32> to vector<2x32xf32>
    %cst_134 = arith.constant 0.000000e+00 : f32
    %332 = vector.broadcast %cst_134 : f32 to vector<2x32xf32>
    %333 = arith.subf %332, %331 : vector<2x32xf32>
    %334 = math.exp %333 : vector<2x32xf32>
    %cst_135 = arith.constant 1.000000e+00 : f32
    %335 = vector.broadcast %cst_135 : f32 to vector<2x32xf32>
    %336 = arith.addf %335, %334 : vector<2x32xf32>
    %cst_136 = arith.constant 1.000000e+00 : f32
    %337 = vector.broadcast %cst_136 : f32 to vector<2x32xf32>
    %338 = arith.divf %337, %336 : vector<2x32xf32>
    %339 = vector.extract_strided_slice %322 {offsets = [0, 64], sizes = [2, 32], strides = [1, 1]} : vector<2x128xf32> to vector<2x32xf32>
    %340 = math.tanh %339 : vector<2x32xf32>
    %341 = vector.extract_strided_slice %322 {offsets = [0, 96], sizes = [2, 32], strides = [1, 1]} : vector<2x128xf32> to vector<2x32xf32>
    %cst_137 = arith.constant 0.000000e+00 : f32
    %342 = vector.broadcast %cst_137 : f32 to vector<2x32xf32>
    %343 = arith.subf %342, %341 : vector<2x32xf32>
    %344 = math.exp %343 : vector<2x32xf32>
    %cst_138 = arith.constant 1.000000e+00 : f32
    %345 = vector.broadcast %cst_138 : f32 to vector<2x32xf32>
    %346 = arith.addf %345, %344 : vector<2x32xf32>
    %cst_139 = arith.constant 1.000000e+00 : f32
    %347 = vector.broadcast %cst_139 : f32 to vector<2x32xf32>
    %348 = arith.divf %347, %346 : vector<2x32xf32>
    %349 = arith.mulf %338, %308 : vector<2x32xf32>
    %350 = arith.mulf %330, %340 : vector<2x32xf32>
    %351 = arith.addf %349, %350 : vector<2x32xf32>
    %352 = math.tanh %351 : vector<2x32xf32>
    %353 = arith.mulf %348, %352 : vector<2x32xf32>
    %354 = arith.index_cast %318 : i32 to index
    %c0_140 = arith.constant 0 : index
    %355 = vector.load %arg9[%354, %c0_140] : memref<16x32xf32, #tpu.memory_space<vmem>>, vector<2x32xf32>
    tpu.vector_store %arg9[%354, %c0_140], %353 {strides = array<i32>} : memref<16x32xf32, #tpu.memory_space<vmem>>, vector<2x32xf32>,
    %c8_i32 = arith.constant 8 : i32
    %c0_141 = arith.constant 0 : index
    %c0_142 = arith.constant 0 : index
    %356 = vector.load %arg9[%c0_141, %c0_142] : memref<16x32xf32, #tpu.memory_space<vmem>>, vector<16x32xf32>
    %c0_143 = arith.constant 0 : index
    %c0_144 = arith.constant 0 : index
    %c0_145 = arith.constant 0 : index
    %357 = vector.load %arg5[%c0_143, %c0_144, %c0_145] : memref<1x32x32xf32, #tpu.memory_space<vmem>>, vector<1x32x32xf32>
    %358 = vector.shape_cast %357 : vector<1x32x32xf32> to vector<32x32xf32>
    %cst_146 = arith.constant dense<0.000000e+00> : vector<16x32xf32>
    %359 = tpu.matmul %356, %358, %cst_146 {dimension_numbers = #tpu.dot_dimension_numbers<[1], [0], [0], [1], [0, 0, 1, 1], [], []>} : vector<16x32xf32>, vector<32x32xf32>, vector<16x32xf32> -> vector<16x32xf32>
    %c0_i32_147 = arith.constant 0 : i32
    %360 = arith.cmpi eq, %arg0, %c0_i32_147 : i32
    %361 = arith.extui %360 : i1 to i32
    %c0_i32_148 = arith.constant 0 : i32
    %362 = arith.cmpi ne, %361, %c0_i32_148 : i32
    scf.if %362 {
      %c0_151 = arith.constant 0 : index
      %c0_152 = arith.constant 0 : index
      %366 = vector.load %arg6[%c0_151, %c0_152] : memref<1x32xf32, #tpu.memory_space<vmem>>, vector<1x32xf32>
      %367 = vector.broadcast %366 : vector<1x32xf32> to vector<16x32xf32>
      %368 = arith.addf %359, %367 : vector<16x32xf32>
      %c0_153 = arith.constant 0 : index
      %c0_154 = arith.constant 0 : index
      %369 = vector.load %arg10[%c0_153, %c0_154] : memref<16x32xf32, #tpu.memory_space<vmem>>, vector<16x32xf32>
      tpu.vector_store %arg10[%c0_153, %c0_154], %368 {strides = array<i32>} : memref<16x32xf32, #tpu.memory_space<vmem>>, vector<16x32xf32>,
    } else {
    }
    %c1_i32_149 = arith.constant 1 : i32
    %363 = arith.cmpi eq, %arg0, %c1_i32_149 : i32
    %364 = arith.extui %363 : i1 to i32
    %c0_i32_150 = arith.constant 0 : i32
    %365 = arith.cmpi ne, %364, %c0_i32_150 : i32
    scf.if %365 {
      %c0_151 = arith.constant 0 : index
      %c0_152 = arith.constant 0 : index
      %366 = vector.load %arg10[%c0_151, %c0_152] : memref<16x32xf32, #tpu.memory_space<vmem>>, vector<16x32xf32>
      %367 = arith.addf %366, %359 : vector<16x32xf32>
      %c0_153 = arith.constant 0 : index
      %c0_154 = arith.constant 0 : index
      %368 = vector.load %arg7[%c0_153, %c0_154] : memref<16x32xf32, #tpu.memory_space<vmem>>, vector<16x32xf32>
      tpu.vector_store %arg7[%c0_153, %c0_154], %367 {strides = array<i32>} : memref<16x32xf32, #tpu.memory_space<vmem>>, vector<16x32xf32>,
    } else {
    }
    return
  }
  func.func @transform_0(%arg0: i32) -> (i32, i32) {
    %c0_i32 = arith.constant 0 : i32
    %c0_i32_0 = arith.constant 0 : i32
    %c0_i32_1 = arith.constant 0 : i32
    return %c0_i32, %c0_i32_0 : i32, i32
  }
  func.func @transform_1(%arg0: i32) -> (i32, i32, i32) {
    %c0_i32 = arith.constant 0 : i32
    %c0_i32_0 = arith.constant 0 : i32
    %c0_i32_1 = arith.constant 0 : i32
    return %arg0, %c0_i32, %c0_i32_0 : i32, i32, i32
  }
  func.func @transform_2(%arg0: i32) -> (i32, i32, i32) {
    %c0_i32 = arith.constant 0 : i32
    %c0_i32_0 = arith.constant 0 : i32
    %c0_i32_1 = arith.constant 0 : i32
    return %arg0, %c0_i32, %c0_i32_0 : i32, i32, i32
  }
  func.func @transform_3(%arg0: i32) -> (i32, i32, i32) {
    %c0_i32 = arith.constant 0 : i32
    %c0_i32_0 = arith.constant 0 : i32
    %c0_i32_1 = arith.constant 0 : i32
    return %arg0, %c0_i32, %c0_i32_0 : i32, i32, i32
  }
  func.func @transform_4(%arg0: i32) -> (i32, i32, i32) {
    %c0_i32 = arith.constant 0 : i32
    %c0_i32_0 = arith.constant 0 : i32
    %c0_i32_1 = arith.constant 0 : i32
    return %arg0, %c0_i32, %c0_i32_0 : i32, i32, i32
  }
  func.func @transform_5(%arg0: i32) -> (i32, i32) {
    %c0_i32 = arith.constant 0 : i32
    %c0_i32_0 = arith.constant 0 : i32
    %c0_i32_1 = arith.constant 0 : i32
    return %c0_i32, %c0_i32_0 : i32, i32
  }
  func.func @transform_6(%arg0: i32) -> (i32, i32) {
    %c0_i32 = arith.constant 0 : i32
    %c0_i32_0 = arith.constant 0 : i32
    %c0_i32_1 = arith.constant 0 : i32
    return %c0_i32, %c0_i32_0 : i32, i32
  }
}

</mosaic_0001>

<llo_original>
// kernel: tpu_custom_call.1
$region0: #{tpu_custom_call.1}
  #allocation0 [shape = 'u32[]', space=smem, size = 0x4, offset = 0x4, fixed_abs, tag = 'smem constant byte address 0x4 - core index']
  #allocation1 [shape = 'u32[144,128]{1,0:T(1,128)}', space=vmem, size = 0x12000, scoped, tag = 'internal scratch']
  #allocation2 [shape = 'f32[16,128]{1,0:T(8,128)}', space=vmem, size = 0x2000, scoped, tag = 'scratch operand']
  #allocation3 [shape = 'f32[16,32]{1,0:T(8,128)}', space=vmem, size = 0x2000, scoped, tag = 'scratch operand']
  #allocation4 [shape = 'f32[16,32]{1,0:T(8,128)}', space=vmem, size = 0x2000, scoped, tag = 'scratch operand']
  %s0 = inlined_call_operand.hbm [shape: f32[16,32], index: 0, kind: input, shape index: {}]
  %s1 = inlined_call_operand.hbm [shape: f32[2,32,128], index: 1, kind: input, shape index: {}]
  %s2 = inlined_call_operand.hbm [shape: f32[2,32,128], index: 2, kind: input, shape index: {}]
  %s3 = inlined_call_operand.vmem [shape: f32[2,1,128], index: 3, kind: input, shape index: {}]
  %s4 = inlined_call_operand.hbm [shape: f32[2,32,32], index: 4, kind: input, shape index: {}]
  %s5 = inlined_call_operand.vmem [shape: f32[1,32], index: 5, kind: input, shape index: {}]
  %s6 = inlined_call_operand.hbm [shape: f32[16,32], index: 6, kind: output, shape index: {}]
  %s7 = sld [smem:[#allocation0]]
  $region81: #{tpu_custom_call.1} parent=0
    _
  %s9 = ssub.s32 1, %s7
  %s10 = scalar_select 0, %s9, %s7
  $region1: #{tpu_custom_call.1} parent=0
    #allocation5 [shape = 'u8[8192]{0}', space=vmem, size = 0x2000, scoped, tag = 'input window, operand 0, single buffered']
    #allocation6 [shape = 's32[2]{0}', space=sflag, size = 0x8, scoped, tag = 'scoped memory for tpu_custom_call.1']
    #allocation7 [shape = 's32[2]{0}', space=sflag, size = 0x8, scoped, tag = 'scoped memory for tpu_custom_call.1']
    #allocation8 [shape = 'u8[32768]{0}', space=vmem, size = 0x8000, scoped, tag = 'input window, operand 1']
    #allocation9 [shape = 's32[2]{0}', space=sflag, size = 0x8, scoped, tag = 'scoped memory for tpu_custom_call.1']
    #allocation10 [shape = 'u8[32768]{0}', space=vmem, size = 0x8000, scoped, tag = 'input window, operand 2']
    #allocation11 [shape = 'u8[32768]{0}', space=vmem, size = 0x8000, scoped, tag = 'input window, operand 4']
    #allocation12 [shape = 's32[2]{0}', space=sflag, size = 0x8, scoped, tag = 'scoped memory for tpu_custom_call.1']
    #allocation13 [shape = 'u8[8192]{0}', space=vmem, size = 0x2000, scoped, tag = 'output window, operand 0, single buffered']
    %11 = vsyncpa [#allocation6], 0
    %12 = vsyncpa [#allocation9], 0
    %s13 = scalar_lea.sflag [#allocation9], 1
    %14 = vsyncpa %s13, 0
    %15 = vsyncpa [#allocation12], 0
    %s16 = scalar_lea.sflag [#allocation12], 1
    %17 = vsyncpa %s16, 0
    %18 = vsyncpa [#allocation7], 0
    loop: start=0, step=1, limit=4
    $region2: #{tpu_custom_call.1} parent=1 // loop_pre_header
      _
    $region3: #{tpu_custom_call.1} parent=1 // loop_header
      %s20 = sphi 0, %s24
      %p21 = scmp.ge.s32.totalorder %s20, 4
      %s28 = sphi 0, %s28
      %s30 = sphi 0, %s28
      %s31 = sphi 0, %s30
      %s45 = sphi 0, %s31
      %s51 = sphi 0, %s53
      %s54 = sphi 0, %s51
      %s55 = sphi 0, %s54
      %s71 = sphi 0, %s55
      %s77 = sphi 0, %s79
      %s80 = sphi 0, %s77
      %s81 = sphi 0, %s80
      %s97 = sphi 0, %s81
      %s103 = sphi 0, %s105
      %s106 = sphi 0, %s103
      %s107 = sphi 0, %s106
      %s123 = sphi 0, %s107
      %s129 = sphi 0, %s131
      %s132 = sphi 0, %s129
      %s133 = sphi 0, %s132
      %s149 = sphi 0, %s133
      %s153 = sphi 0, %s153
      %s155 = sphi 0, %s153
      %s156 = sphi 0, %s155
      %s170 = sphi 0, %s156
      %s174 = sphi 0, %s174
      %s176 = sphi 0, %s174
      %s177 = sphi 0, %s176
      %s191 = sphi 0, %s177
    $region4: #{tpu_custom_call.1} parent=1 // loop_header_branch
      %23 = sbr.rel (%p21) target = $region8
    $region5: #{tpu_custom_call.1} parent=1 // loop_body
      %s25 = ssub.s32 %s20, 1
      %s26 = ssub.s32 %s20, 2
      %s27 = sadd.s32 %s20, 1
      %s29 = sadd.s32 %s28, 1
      %p32 = scmp.eq.s32.totalorder %s20, 1
      %p33 = scmp.ne.s32.totalorder %s28, %s30
      %p34 = scmp.eq.s32.totalorder %s20, 0
      %p35 = por %p33, %p34
      %p36 = scmp.ne.s32.totalorder %s28, %s30
      %p37 = scmp.eq.s32.totalorder %s25, 1
      %p38 = por %p36, %p37
      %p39 = scmp.ne.s32.totalorder %s30, %s31
      %p40 = scmp.eq.s32.totalorder %s25, 0
      %p41 = por %p39, %p40
      %p42 = scmp.ne.s32.totalorder %s30, %s31
      %p43 = scmp.eq.s32.totalorder %s26, 1
      %p44 = por %p42, %p43
      %p46 = scmp.ne.s32.totalorder %s31, %s45
      %p47 = scmp.eq.s32.totalorder %s26, 0
      %p48 = por %p46, %p47
      %s49 = ssub.s32 %s20, %s27
      %p50 = scmp.eq.s32.totalorder %s49, 0
      %s52 = sadd.s32 %s51, 1
      %s53 = scalar_select %p50, %s51, %s52
      %p56 = pneg %p50
      %p57 = scmp.eq.s32.totalorder %s20, 1
      %p58 = por %p56, %p57
      %p59 = scmp.ne.s32.totalorder %s51, %s54
      %p60 = scmp.eq.s32.totalorder %s20, 0
      %p61 = por %p59, %p60
      %p62 = scmp.ne.s32.totalorder %s51, %s54
      %p63 = scmp.eq.s32.totalorder %s25, 1
      %p64 = por %p62, %p63
      %p65 = scmp.ne.s32.totalorder %s54, %s55
      %p66 = scmp.eq.s32.totalorder %s25, 0
      %p67 = por %p65, %p66
      %p68 = scmp.ne.s32.totalorder %s54, %s55
      %p69 = scmp.eq.s32.totalorder %s26, 1
      %p70 = por %p68, %p69
      %p72 = scmp.ne.s32.totalorder %s55, %s71
      %p73 = scmp.eq.s32.totalorder %s26, 0
      %p74 = por %p72, %p73
      %s75 = ssub.s32 %s20, %s27
      %p76 = scmp.eq.s32.totalorder %s75, 0
      %s78 = sadd.s32 %s77, 1
      %s79 = scalar_select %p76, %s77, %s78
      %p82 = pneg %p76
      %p83 = scmp.eq.s32.totalorder %s20, 1
      %p84 = por %p82, %p83
      %p85 = scmp.ne.s32.totalorder %s77, %s80
      %p86 = scmp.eq.s32.totalorder %s20, 0
      %p87 = por %p85, %p86
      %p88 = scmp.ne.s32.totalorder %s77, %s80
      %p89 = scmp.eq.s32.totalorder %s25, 1
      %p90 = por %p88, %p89
      %p91 = scmp.ne.s32.totalorder %s80, %s81
      %p92 = scmp.eq.s32.totalorder %s25, 0
      %p93 = por %p91, %p92
      %p94 = scmp.ne.s32.totalorder %s80, %s81
      %p95 = scmp.eq.s32.totalorder %s26, 1
      %p96 = por %p94, %p95
      %p98 = scmp.ne.s32.totalorder %s81, %s97
      %p99 = scmp.eq.s32.totalorder %s26, 0
      %p100 = por %p98, %p99
      %s101 = ssub.s32 %s20, %s27
      %p102 = scmp.eq.s32.totalorder %s101, 0
      %s104 = sadd.s32 %s103, 1
      %s105 = scalar_select %p102, %s103, %s104
      %p108 = pneg %p102
      %p109 = scmp.eq.s32.totalorder %s20, 1
      %p110 = por %p108, %p109
      %p111 = scmp.ne.s32.totalorder %s103, %s106
      %p112 = scmp.eq.s32.totalorder %s20, 0
      %p113 = por %p111, %p112
      %p114 = scmp.ne.s32.totalorder %s103, %s106
      %p115 = scmp.eq.s32.totalorder %s25, 1
      %p116 = por %p114, %p115
      %p117 = scmp.ne.s32.totalorder %s106, %s107
      %p118 = scmp.eq.s32.totalorder %s25, 0
      %p119 = por %p117, %p118
      %p120 = scmp.ne.s32.totalorder %s106, %s107
      %p121 = scmp.eq.s32.totalorder %s26, 1
      %p122 = por %p120, %p121
      %p124 = scmp.ne.s32.totalorder %s107, %s123
      %p125 = scmp.eq.s32.totalorder %s26, 0
      %p126 = por %p124, %p125
      %s127 = ssub.s32 %s20, %s27
      %p128 = scmp.eq.s32.totalorder %s127, 0
      %s130 = sadd.s32 %s129, 1
      %s131 = scalar_select %p128, %s129, %s130
      %p134 = pneg %p128
      %p135 = scmp.eq.s32.totalorder %s20, 1
      %p136 = por %p134, %p135
      %p137 = scmp.ne.s32.totalorder %s129, %s132
      %p138 = scmp.eq.s32.totalorder %s20, 0
      %p139 = por %p137, %p138
      %p140 = scmp.ne.s32.totalorder %s129, %s132
      %p141 = scmp.eq.s32.totalorder %s25, 1
      %p142 = por %p140, %p141
      %p143 = scmp.ne.s32.totalorder %s132, %s133
      %p144 = scmp.eq.s32.totalorder %s25, 0
      %p145 = por %p143, %p144
      %p146 = scmp.ne.s32.totalorder %s132, %s133
      %p147 = scmp.eq.s32.totalorder %s26, 1
      %p148 = por %p146, %p147
      %p150 = scmp.ne.s32.totalorder %s133, %s149
      %p151 = scmp.eq.s32.totalorder %s26, 0
      %p152 = por %p150, %p151
      %s154 = sadd.s32 %s153, 1
      %p157 = scmp.eq.s32.totalorder %s20, 1
      %p158 = scmp.ne.s32.totalorder %s153, %s155
      %p159 = scmp.eq.s32.totalorder %s20, 0
      %p160 = por %p158, %p159
      %p161 = scmp.ne.s32.totalorder %s153, %s155
      %p162 = scmp.eq.s32.totalorder %s25, 1
      %p163 = por %p161, %p162
      %p164 = scmp.ne.s32.totalorder %s155, %s156
      %p165 = scmp.eq.s32.totalorder %s25, 0
      %p166 = por %p164, %p165
      %p167 = scmp.ne.s32.totalorder %s155, %s156
      %p168 = scmp.eq.s32.totalorder %s26, 1
      %p169 = por %p167, %p168
      %p171 = scmp.ne.s32.totalorder %s156, %s170
      %p172 = scmp.eq.s32.totalorder %s26, 0
      %p173 = por %p171, %p172
      %s175 = sadd.s32 %s174, 1
      %p178 = scmp.eq.s32.totalorder %s20, 1
      %p179 = scmp.ne.s32.totalorder %s174, %s176
      %p180 = scmp.eq.s32.totalorder %s20, 0
      %p181 = por %p179, %p180
      %p182 = scmp.ne.s32.totalorder %s174, %s176
      %p183 = scmp.eq.s32.totalorder %s25, 1
      %p184 = por %p182, %p183
      %p185 = scmp.ne.s32.totalorder %s176, %s177
      %p186 = scmp.eq.s32.totalorder %s25, 0
      %p187 = por %p185, %p186
      %p188 = scmp.ne.s32.totalorder %s176, %s177
      %p189 = scmp.eq.s32.totalorder %s26, 1
      %p190 = por %p188, %p189
      %p192 = scmp.ne.s32.totalorder %s177, %s191
      %p193 = scmp.eq.s32.totalorder %s26, 0
      %p194 = por %p192, %p193
      %p195 = scmp.le.s32.totalorder 1, %s20
      %p196 = scmp.lt.s32.totalorder %s20, 3
      %p197 = pnand %p195, %p196
      %p198 = pneg %p197
      // Predicated region
      $region9: #{tpu_custom_call.1} parent=5 // pred_check
        _
      $region10: #{tpu_custom_call.1} parent=5 // pred_check_branch
        %200 = sbr.rel (%p197) target = $region12
      $region11: #{tpu_custom_call.1} parent=5 // pred_region
        %s201 = ssub.s32 %s20, 1
        // Predicated region
        $region13: #{tpu_custom_call.1} parent=11 // pred_check
          %p202 = pneg %p41
        $region14: #{tpu_custom_call.1} parent=11 // pred_check_branch
          %204 = sbr.rel (%p202) target = $region16
        $region15: #{tpu_custom_call.1} parent=11 // pred_region
          %s206 = ssub.s32 256, 256
          %207 = vsyncadd [#allocation6], %s206
          %s208 = sshll.u32 [#allocation5], 4
          %s209 = int_to_ptr.vmem [resolvable:$true] %s208
          %214 = dma.hbm_to_vmem [thread:$0]  %s0, 256, %s209, [#allocation6], 128, 128, 8
        $region16: #{tpu_custom_call.1} parent=11 // pred_fallthru
          _
        // Predicated region
        $region17: #{tpu_custom_call.1} parent=11 // pred_check
          %p215 = pneg %p166
        $region18: #{tpu_custom_call.1} parent=11 // pred_check_branch
          %217 = sbr.rel (%p215) target = $region20
        $region19: #{tpu_custom_call.1} parent=11 // pred_region
          _
        $region20: #{tpu_custom_call.1} parent=11 // pred_fallthru
          _
      $region12: #{tpu_custom_call.1} parent=5 // pred_fallthru
        _
      %p218 = scmp.lt.s32.totalorder %s20, 2
      // Predicated region
      $region21: #{tpu_custom_call.1} parent=5 // pred_check
        %p219 = pneg %p218
      $region22: #{tpu_custom_call.1} parent=5 // pred_check_branch
        %221 = sbr.rel (%p219) target = $region24
      $region23: #{tpu_custom_call.1} parent=5 // pred_region
        // Predicated region
        $region25: #{tpu_custom_call.1} parent=23 // pred_check
          %p222 = pneg %p61
        $region26: #{tpu_custom_call.1} parent=23 // pred_check_branch
          %224 = sbr.rel (%p222) target = $region28
        $region27: #{tpu_custom_call.1} parent=23 // pred_region
          %s225 = sand.u32 %s20, 1
          %s226 = scalar_lea.sflag [#allocation9], %s225
          %s227 = sand.u32 %s51, 1
          %s228 = smul.addr %s227, 32
          %s229 = scalar_lea.vmem [#allocation8], %s228
          %s231 = ssub.s32 512, 512
          %232 = vsyncadd %s226, %s231
          %s233 = smul.addr %s20, 4
          %s234 = smul.addr %s233, 128
          %s235 = scalar_lea.hbm %s1, %s234
          %s236 = sshll.u32 %s229, 4
          %s237 = int_to_ptr.vmem [resolvable:$true] %s236
          %242 = dma.hbm_to_vmem [thread:$0]  %s235, 512, %s237, %s226, 128, 128, 8
        $region28: #{tpu_custom_call.1} parent=23 // pred_fallthru
          _
        // Predicated region
        $region29: #{tpu_custom_call.1} parent=23 // pred_check
          %p243 = pneg %p87
        $region30: #{tpu_custom_call.1} parent=23 // pred_check_branch
          %245 = sbr.rel (%p243) target = $region32
        $region31: #{tpu_custom_call.1} parent=23 // pred_region
          %s246 = sand.u32 %s20, 1
          %s247 = scalar_lea.sflag [#allocation9], %s246
          %s248 = sand.u32 %s77, 1
          %s249 = smul.addr %s248, 32
          %s250 = scalar_lea.vmem [#allocation10], %s249
          %s252 = ssub.s32 512, 512
          %253 = vsyncadd %s247, %s252
          %s254 = smul.addr %s20, 4
          %s255 = smul.addr %s254, 128
          %s256 = scalar_lea.hbm %s2, %s255
          %s257 = sshll.u32 %s250, 4
          %s258 = int_to_ptr.vmem [resolvable:$true] %s257
          %263 = dma.hbm_to_vmem [thread:$0]  %s256, 512, %s258, %s247, 128, 128, 8
        $region32: #{tpu_custom_call.1} parent=23 // pred_fallthru
          _
        // Predicated region
        $region33: #{tpu_custom_call.1} parent=23 // pred_check
          %p264 = pneg %p113
        $region34: #{tpu_custom_call.1} parent=23 // pred_check_branch
          %266 = sbr.rel (%p264) target = $region36
        $region35: #{tpu_custom_call.1} parent=23 // pred_region
          %p267 = scmp.lt.s32.totalorder %s20, 1
          %s268 = scalar_select %p267, %s20, 1
          %s269 = scalar_lea.vmem %s3, %s268
        $region36: #{tpu_custom_call.1} parent=23 // pred_fallthru
          _
        // Predicated region
        $region37: #{tpu_custom_call.1} parent=23 // pred_check
          %p270 = pneg %p139
        $region38: #{tpu_custom_call.1} parent=23 // pred_check_branch
          %272 = sbr.rel (%p270) target = $region40
        $region39: #{tpu_custom_call.1} parent=23 // pred_region
          %s273 = sand.u32 %s129, 1
          %s274 = scalar_lea.sflag [#allocation12], %s273
          %s275 = sand.u32 %s129, 1
          %s276 = smul.addr %s275, 32
          %s277 = scalar_lea.vmem [#allocation11], %s276
          %s279 = ssub.s32 512, 512
          %280 = vsyncadd %s274, %s279
          %s281 = smul.addr %s20, 4
          %s282 = smul.addr %s281, 128
          %s283 = scalar_lea.hbm %s4, %s282
          %s284 = sshll.u32 %s277, 4
          %s285 = int_to_ptr.vmem [resolvable:$true] %s284
          %290 = dma.hbm_to_vmem [thread:$0]  %s283, 512, %s285, %s274, 128, 128, 8
        $region40: #{tpu_custom_call.1} parent=23 // pred_fallthru
          _
      $region24: #{tpu_custom_call.1} parent=5 // pred_fallthru
        _
      %p291 = scmp.le.s32.totalorder 1, %s20
      %p292 = scmp.lt.s32.totalorder %s20, 3
      %p293 = pnand %p291, %p292
      %p294 = pneg %p293
      // Predicated region
      $region41: #{tpu_custom_call.1} parent=5 // pred_check
        _
      $region42: #{tpu_custom_call.1} parent=5 // pred_check_branch
        %296 = sbr.rel (%p293) target = $region44
      $region43: #{tpu_custom_call.1} parent=5 // pred_region
        %s297 = ssub.s32 %s20, 1
        // Predicated region
        $region45: #{tpu_custom_call.1} parent=43 // pred_check
          %p298 = pneg %p41
        $region46: #{tpu_custom_call.1} parent=43 // pred_check_branch
          %300 = sbr.rel (%p298) target = $region48
        $region47: #{tpu_custom_call.1} parent=43 // pred_region
          %301 = dma.done [#allocation6], 256
        $region48: #{tpu_custom_call.1} parent=43 // pred_fallthru
          _
        %s302 = sand.u32 %s25, 1
        %s303 = scalar_lea.sflag [#allocation9], %s302
        %s304 = sand.u32 %s54, 1
        %s305 = smul.addr %s304, 32
        %s306 = scalar_lea.vmem [#allocation8], %s305
        // Predicated region
        $region49: #{tpu_custom_call.1} parent=43 // pred_check
          %p307 = pneg %p67
        $region50: #{tpu_custom_call.1} parent=43 // pred_check_branch
          %309 = sbr.rel (%p307) target = $region52
        $region51: #{tpu_custom_call.1} parent=43 // pred_region
          %310 = dma.done %s303, 512
        $region52: #{tpu_custom_call.1} parent=43 // pred_fallthru
          _
        %s311 = sand.u32 %s25, 1
        %s312 = scalar_lea.sflag [#allocation9], %s311
        %s313 = sand.u32 %s80, 1
        %s314 = smul.addr %s313, 32
        %s315 = scalar_lea.vmem [#allocation10], %s314
        // Predicated region
        $region53: #{tpu_custom_call.1} parent=43 // pred_check
          %p316 = pneg %p93
        $region54: #{tpu_custom_call.1} parent=43 // pred_check_branch
          %318 = sbr.rel (%p316) target = $region56
        $region55: #{tpu_custom_call.1} parent=43 // pred_region
          %319 = dma.done %s312, 512
        $region56: #{tpu_custom_call.1} parent=43 // pred_fallthru
          _
        %s320 = sand.u32 %s132, 1
        %s321 = scalar_lea.sflag [#allocation12], %s320
        %s322 = sand.u32 %s132, 1
        %s323 = smul.addr %s322, 32
        %s324 = scalar_lea.vmem [#allocation11], %s323
        // Predicated region
        $region57: #{tpu_custom_call.1} parent=43 // pred_check
          %p325 = pneg %p145
        $region58: #{tpu_custom_call.1} parent=43 // pred_check_branch
          %327 = sbr.rel (%p325) target = $region60
        $region59: #{tpu_custom_call.1} parent=43 // pred_region
          %328 = dma.done %s321, 512
        $region60: #{tpu_custom_call.1} parent=43 // pred_fallthru
          _
        %p329 = pneg %p41
        %p330 = pneg %p38
        %s331 = sand.u32 %s25, 1
        %s332 = scalar_lea.sflag [#allocation9], %s331
        %s333 = sand.u32 %s54, 1
        %s334 = smul.addr %s333, 32
        %s335 = scalar_lea.vmem [#allocation8], %s334
        %p336 = pneg %p67
        %p337 = pneg %p64
        %s338 = sand.u32 %s25, 1
        %s339 = scalar_lea.sflag [#allocation9], %s338
        %s340 = sand.u32 %s80, 1
        %s341 = smul.addr %s340, 32
        %s342 = scalar_lea.vmem [#allocation10], %s341
        %p343 = pneg %p93
        %p344 = pneg %p90
        %p345 = scmp.lt.s32.totalorder %s25, 1
        %s346 = scalar_select %p345, %s25, 1
        %s347 = scalar_lea.vmem %s3, %s346
        %p348 = pneg %p119
        %p349 = pneg %p116
        %s350 = sand.u32 %s132, 1
        %s351 = scalar_lea.sflag [#allocation12], %s350
        %s352 = sand.u32 %s132, 1
        %s353 = smul.addr %s352, 32
        %s354 = scalar_lea.vmem [#allocation11], %s353
        %p355 = pneg %p145
        %p356 = pneg %p142
        %p357 = pneg %p166
        %p358 = pneg %p163
        %p359 = pneg %p187
        %p360 = pneg %p184
        %p361 = scmp.lt.s32.totalorder %s25, 1
        %s362 = scalar_select %p361, %s25, 1
        %s363 = scalar_lea.vmem %s3, %s362
        %v364 = vld [vmem:[#allocation5] sm:$0xff]
        %v365 = vld [vmem:[#allocation5 + $0x8] sm:$0xff]
        %v366 = vld [vmem:[%s306] sm:$0xff]
        %v367 = vld [vmem:[%s306 + $0x8] sm:$0xff]
        %v368 = vld [vmem:[%s306 + $0x10] sm:$0xff]
        %v369 = vld [vmem:[%s306 + $0x18] sm:$0xff]
        %v370 = vld [vmem:[%s363] sm:$0x1]
        %v372 = vlaneseq
        %v373 = vshrl.u32 %v372, 7
        %v374 = vsub.s32 0, %v373
        %v375 = vrot.slane %v370, %v374
        %vm377 = vcmask 261120
        %v379 = vsel %vm377, %v364, 0
        %v382 = vsel %vm377, %v365, 0
        %384 = vmatprep.subr.mxu0 0.0
        %385 = vmatpush1.msra.mxu0 0.0
        %386 = vmatprep.subr.mxu0 0.0
        %387 = vmatpush1.msra.mxu0 0.0
        %388 = vmatprep.subr.mxu0 0.0
        %389 = vmatpush1.msra.mxu0 0.0
        %390 = vmatprep.subr.mxu0 0.0
        %391 = vmatpush1.msra.mxu0 0.0
        %392 = vmatprep.subr.mxu0 0.0
        %393 = vmatpush1.msra.mxu0 0.0
        %394 = vmatprep.subr.mxu0 0.0
        %395 = vmatpush1.msra.mxu0 0.0
        %396 = vmatprep.subr.mxu0 0.0
        %397 = vmatpush1.msra.mxu0 0.0
        %398 = vmatprep.subr.mxu0 0.0
        %399 = vmatpush1.msra.mxu0 0.0
        %400 = vmatprep.subr.mxu0 0.0
        %401 = vmatpush1.msra.mxu0 0.0
        %402 = vmatprep.subr.mxu0 0.0
        %403 = vmatpush1.msra.mxu0 0.0
        %404 = vmatprep.subr.mxu0 0.0
        %405 = vmatpush1.msra.mxu0 0.0
        %406 = vmatprep.subr.mxu0 0.0
        %407 = vmatpush1.msra.mxu0 0.0
        %408 = vmatprep.subr.mxu0 0.0
        %409 = vmatpush1.msra.mxu0 %v369
        %410 = vmatprep.subr.mxu0 0.0
        %411 = vmatpush1.msra.mxu0 %v368
        %412 = vmatprep.subr.mxu0 0.0
        %413 = vmatpush1.msra.mxu0 %v367
        %414 = vmatprep.subr.mxu0 0.0
        %415 = vmatpush1.msra.mxu0 %v366
        %416 = vmatprep.subr.mxu0 0.0
        %417 = vmatpush2.msra.mxu0 0.0
        %418 = vmatprep.subr.mxu0 0.0
        %419 = vmatpush2.msra.mxu0 0.0
        %420 = vmatprep.subr.mxu0 0.0
        %421 = vmatpush2.msra.mxu0 0.0
        %422 = vmatprep.subr.mxu0 0.0
        %423 = vmatpush2.msra.mxu0 0.0
        %424 = vmatprep.subr.mxu0 0.0
        %425 = vmatpush2.msra.mxu0 0.0
        %426 = vmatprep.subr.mxu0 0.0
        %427 = vmatpush2.msra.mxu0 0.0
        %428 = vmatprep.subr.mxu0 0.0
        %429 = vmatpush2.msra.mxu0 0.0
        %430 = vmatprep.subr.mxu0 0.0
        %431 = vmatpush2.msra.mxu0 0.0
        %432 = vmatprep.subr.mxu0 0.0
        %433 = vmatpush2.msra.mxu0 0.0
        %434 = vmatprep.subr.mxu0 0.0
        %435 = vmatpush2.msra.mxu0 0.0
        %436 = vmatprep.subr.mxu0 0.0
        %437 = vmatpush2.msra.mxu0 0.0
        %438 = vmatprep.subr.mxu0 0.0
        %439 = vmatpush2.msra.mxu0 0.0
        %440 = vmatprep.subr.mxu0 0.0
        %441 = vmatpush2.msra.mxu0 0.0
        %442 = vmatprep.subr.mxu0 0.0
        %443 = vmatpush2.msra.mxu0 0.0
        %444 = vmatprep.subr.mxu0 0.0
        %445 = vmatpush2.msra.mxu0 0.0
        %446 = vmatprep.subr.mxu0 0.0
        %447 = vmatpush2.msra.mxu0 0.0
        %448 = vmatprep.mubr.f32.mxu0 0.0
        %449 = vmatmul.mubr.f32.gmra.mxu0 %v379
        %v450 = vpop.f32.mrf.mxu0
        %v451 = vadd.f32 %v375, %v450
        %v452 = vpop.f32.mrf.mxu0
        %453 = vmatprep.mubr.f32.mxu0 0.0
        %454 = vmatmul.mubr.f32.gmra.mxu0 %v382
        %v455 = vpop.f32.mrf.mxu0
        %v456 = vadd.f32 %v375, %v455
        %v457 = vpop.f32.mrf.mxu0
        %458 = vdwg.mxu0
        %459 = vst [vmem:[#allocation2] sm:$0xff] %v451
        %460 = vst [vmem:[#allocation2 + $0x8] sm:$0xff] %v456
        %v461 = vld [vmem:[%s315] sm:$0xff]
        %v462 = vld [vmem:[%s315 + $0x8] sm:$0xff]
        %v463 = vld [vmem:[%s315 + $0x10] sm:$0xff]
        %v464 = vld [vmem:[%s315 + $0x18] sm:$0xff]
        %s465 = smul.u32 %s25, 14
        %s466 = scalar_lea.vmem [#allocation2], %s465
        %v467 = vld [vmem:[%s466] sm:$0x3]
        %v469 = vsel %vm377, 0.0, 0
        %471 = vmatprep.subr.mxu0 0.0
        %472 = vmatpush1.msra.mxu0 0.0
        %473 = vmatprep.subr.mxu0 0.0
        %474 = vmatpush1.msra.mxu0 0.0
        %475 = vmatprep.subr.mxu0 0.0
        %476 = vmatpush1.msra.mxu0 0.0
        %477 = vmatprep.subr.mxu0 0.0
        %478 = vmatpush1.msra.mxu0 0.0
        %479 = vmatprep.subr.mxu0 0.0
        %480 = vmatpush1.msra.mxu0 0.0
        %481 = vmatprep.subr.mxu0 0.0
        %482 = vmatpush1.msra.mxu0 0.0
        %483 = vmatprep.subr.mxu0 0.0
        %484 = vmatpush1.msra.mxu0 0.0
        %485 = vmatprep.subr.mxu0 0.0
        %486 = vmatpush1.msra.mxu0 0.0
        %487 = vmatprep.subr.mxu0 0.0
        %488 = vmatpush1.msra.mxu0 0.0
        %489 = vmatprep.subr.mxu0 0.0
        %490 = vmatpush1.msra.mxu0 0.0
        %491 = vmatprep.subr.mxu0 0.0
        %492 = vmatpush1.msra.mxu0 0.0
        %493 = vmatprep.subr.mxu0 0.0
        %494 = vmatpush1.msra.mxu0 0.0
        %495 = vmatprep.subr.mxu0 0.0
        %496 = vmatpush1.msra.mxu0 %v464
        %497 = vmatprep.subr.mxu0 0.0
        %498 = vmatpush1.msra.mxu0 %v463
        %499 = vmatprep.subr.mxu0 0.0
        %500 = vmatpush1.msra.mxu0 %v462
        %501 = vmatprep.subr.mxu0 0.0
        %502 = vmatpush1.msra.mxu0 %v461
        %503 = vmatprep.subr.mxu0 0.0
        %504 = vmatpush2.msra.mxu0 0.0
        %505 = vmatprep.subr.mxu0 0.0
        %506 = vmatpush2.msra.mxu0 0.0
        %507 = vmatprep.subr.mxu0 0.0
        %508 = vmatpush2.msra.mxu0 0.0
        %509 = vmatprep.subr.mxu0 0.0
        %510 = vmatpush2.msra.mxu0 0.0
        %511 = vmatprep.subr.mxu0 0.0
        %512 = vmatpush2.msra.mxu0 0.0
        %513 = vmatprep.subr.mxu0 0.0
        %514 = vmatpush2.msra.mxu0 0.0
        %515 = vmatprep.subr.mxu0 0.0
        %516 = vmatpush2.msra.mxu0 0.0
        %517 = vmatprep.subr.mxu0 0.0
        %518 = vmatpush2.msra.mxu0 0.0
        %519 = vmatprep.subr.mxu0 0.0
        %520 = vmatpush2.msra.mxu0 0.0
        %521 = vmatprep.subr.mxu0 0.0
        %522 = vmatpush2.msra.mxu0 0.0
        %523 = vmatprep.subr.mxu0 0.0
        %524 = vmatpush2.msra.mxu0 0.0
        %525 = vmatprep.subr.mxu0 0.0
        %526 = vmatpush2.msra.mxu0 0.0
        %527 = vmatprep.subr.mxu0 0.0
        %528 = vmatpush2.msra.mxu0 0.0
        %529 = vmatprep.subr.mxu0 0.0
        %530 = vmatpush2.msra.mxu0 0.0
        %531 = vmatprep.subr.mxu0 0.0
        %532 = vmatpush2.msra.mxu0 0.0
        %533 = vmatprep.subr.mxu0 0.0
        %534 = vmatpush2.msra.mxu0 0.0
        %535 = vmatprep.mubr.f32.mxu0 0.0
        %536 = vmatmul.mubr.f32.gmra.mxu0 %v469
        %v537 = vpop.f32.mrf.mxu0
        %v538 = vadd.f32 0.0, %v537
        %v539 = vpop.f32.mrf.mxu0
        %540 = vdwg.mxu0
        %v541 = vadd.f32 %v467, %v538
        %v542 = vsub.f32 0.0, %v541
        %v543 = vmul.f32 %v542, 1.442695
        %v544 = vpow.pop %v543
        %v545 = vadd.f32 %v544, 1.0
        %v546 = vrcp.pop %v545
        %v547 = vmul.f32 1.0, %v546
        %v548 = vtanh.pop %v541
        %v549 = vmul.f32 %v547, 0.0
        %551 = vrot.lane.b32.xlu0 %v548, 64
        %v552 = vpop.permute.xlu0 %551
        %v554 = vmul.f32 %v547, %v552
        %556 = vrot.lane.b32.xlu0 %v554, 32
        %v557 = vpop.permute.xlu0 %556
        %v559 = vadd.f32 %v549, %v557
        %v560 = vtanh.pop %v559
        %562 = vrot.lane.b32.xlu0 %v560, 64
        %v563 = vpop.permute.xlu0 %562
        %v565 = vmul.f32 %v547, %v563
        %567 = vrot.lane.b32.xlu0 %v565, 32
        %v568 = vpop.permute.xlu0 %567
        %s570 = scalar_lea.vmem [#allocation3], %s465
        %vm571 = vcmask 254976
        %572 = vst.msk [vmem:[%s570] sm:$0x3] %vm571, %v568
        %s573 = smul.u32 %s25, 7
        %s574 = smul.u32 %s25, 2
        %s575 = ssub.s32 1, %s574
        %s576 = sadd.s32 %s573, %s575
        %s577 = smul.u32 %s576, 2
        %s578 = scalar_lea.vmem [#allocation2], %s577
        %v579 = vld [vmem:[%s578] sm:$0x3]
        %v580 = vsel %vm377, %v568, 0
        %582 = vmatprep.subr.mxu0 0.0
        %583 = vmatpush1.msra.mxu0 0.0
        %584 = vmatprep.subr.mxu0 0.0
        %585 = vmatpush1.msra.mxu0 0.0
        %586 = vmatprep.subr.mxu0 0.0
        %587 = vmatpush1.msra.mxu0 0.0
        %588 = vmatprep.subr.mxu0 0.0
        %589 = vmatpush1.msra.mxu0 0.0
        %590 = vmatprep.subr.mxu0 0.0
        %591 = vmatpush1.msra.mxu0 0.0
        %592 = vmatprep.subr.mxu0 0.0
        %593 = vmatpush1.msra.mxu0 0.0
        %594 = vmatprep.subr.mxu0 0.0
        %595 = vmatpush1.msra.mxu0 0.0
        %596 = vmatprep.subr.mxu0 0.0
        %597 = vmatpush1.msra.mxu0 0.0
        %598 = vmatprep.subr.mxu0 0.0
        %599 = vmatpush1.msra.mxu0 0.0
        %600 = vmatprep.subr.mxu0 0.0
        %601 = vmatpush1.msra.mxu0 0.0
        %602 = vmatprep.subr.mxu0 0.0
        %603 = vmatpush1.msra.mxu0 0.0
        %604 = vmatprep.subr.mxu0 0.0
        %605 = vmatpush1.msra.mxu0 0.0
        %606 = vmatprep.subr.mxu0 0.0
        %607 = vmatpush1.msra.mxu0 %v464
        %608 = vmatprep.subr.mxu0 0.0
        %609 = vmatpush1.msra.mxu0 %v463
        %610 = vmatprep.subr.mxu0 0.0
        %611 = vmatpush1.msra.mxu0 %v462
        %612 = vmatprep.subr.mxu0 0.0
        %613 = vmatpush1.msra.mxu0 %v461
        %614 = vmatprep.subr.mxu0 0.0
        %615 = vmatpush2.msra.mxu0 0.0
        %616 = vmatprep.subr.mxu0 0.0
        %617 = vmatpush2.msra.mxu0 0.0
        %618 = vmatprep.subr.mxu0 0.0
        %619 = vmatpush2.msra.mxu0 0.0
        %620 = vmatprep.subr.mxu0 0.0
        %621 = vmatpush2.msra.mxu0 0.0
        %622 = vmatprep.subr.mxu0 0.0
        %623 = vmatpush2.msra.mxu0 0.0
        %624 = vmatprep.subr.mxu0 0.0
        %625 = vmatpush2.msra.mxu0 0.0
        %626 = vmatprep.subr.mxu0 0.0
        %627 = vmatpush2.msra.mxu0 0.0
        %628 = vmatprep.subr.mxu0 0.0
        %629 = vmatpush2.msra.mxu0 0.0
        %630 = vmatprep.subr.mxu0 0.0
        %631 = vmatpush2.msra.mxu0 0.0
        %632 = vmatprep.subr.mxu0 0.0
        %633 = vmatpush2.msra.mxu0 0.0
        %634 = vmatprep.subr.mxu0 0.0
        %635 = vmatpush2.msra.mxu0 0.0
        %636 = vmatprep.subr.mxu0 0.0
        %637 = vmatpush2.msra.mxu0 0.0
        %638 = vmatprep.subr.mxu0 0.0
        %639 = vmatpush2.msra.mxu0 0.0
        %640 = vmatprep.subr.mxu0 0.0
        %641 = vmatpush2.msra.mxu0 0.0
        %642 = vmatprep.subr.mxu0 0.0
        %643 = vmatpush2.msra.mxu0 0.0
        %644 = vmatprep.subr.mxu0 0.0
        %645 = vmatpush2.msra.mxu0 0.0
        %646 = vmatprep.mubr.f32.mxu0 0.0
        %647 = vmatmul.mubr.f32.gmra.mxu0 %v580
        %v648 = vpop.f32.mrf.mxu0
        %v649 = vadd.f32 0.0, %v648
        %v650 = vpop.f32.mrf.mxu0
        %651 = vdwg.mxu0
        %v652 = vadd.f32 %v579, %v649
        %v653 = vsub.f32 0.0, %v652
        %v654 = vmul.f32 %v653, 1.442695
        %v655 = vpow.pop %v654
        %v656 = vadd.f32 %v655, 1.0
        %v657 = vrcp.pop %v656
        %v658 = vmul.f32 1.0, %v657
        %v659 = vtanh.pop %v652
        %v660 = vmul.f32 %v658, %v559
        %662 = vrot.lane.b32.xlu0 %v659, 64
        %v663 = vpop.permute.xlu0 %662
        %v665 = vmul.f32 %v658, %v663
        %667 = vrot.lane.b32.xlu0 %v665, 32
        %v668 = vpop.permute.xlu0 %667
        %v670 = vadd.f32 %v660, %v668
        %v671 = vtanh.pop %v670
        %673 = vrot.lane.b32.xlu0 %v671, 64
        %v674 = vpop.permute.xlu0 %673
        %v676 = vmul.f32 %v658, %v674
        %678 = vrot.lane.b32.xlu0 %v676, 32
        %v679 = vpop.permute.xlu0 %678
        %s681 = scalar_lea.vmem [#allocation3], %s577
        %682 = vst.msk [vmem:[%s681] sm:$0x3] %vm571, %v679
        %s683 = smul.u32 %s575, 2
        %s684 = sadd.s32 %s573, %s683
        %s685 = smul.u32 %s684, 2
        %s686 = scalar_lea.vmem [#allocation2], %s685
        %v687 = vld [vmem:[%s686] sm:$0x3]
        %v688 = vsel %vm377, %v679, 0
        %690 = vmatprep.subr.mxu0 0.0
        %691 = vmatpush1.msra.mxu0 0.0
        %692 = vmatprep.subr.mxu0 0.0
        %693 = vmatpush1.msra.mxu0 0.0
        %694 = vmatprep.subr.mxu0 0.0
        %695 = vmatpush1.msra.mxu0 0.0
        %696 = vmatprep.subr.mxu0 0.0
        %697 = vmatpush1.msra.mxu0 0.0
        %698 = vmatprep.subr.mxu0 0.0
        %699 = vmatpush1.msra.mxu0 0.0
        %700 = vmatprep.subr.mxu0 0.0
        %701 = vmatpush1.msra.mxu0 0.0
        %702 = vmatprep.subr.mxu0 0.0
        %703 = vmatpush1.msra.mxu0 0.0
        %704 = vmatprep.subr.mxu0 0.0
        %705 = vmatpush1.msra.mxu0 0.0
        %706 = vmatprep.subr.mxu0 0.0
        %707 = vmatpush1.msra.mxu0 0.0
        %708 = vmatprep.subr.mxu0 0.0
        %709 = vmatpush1.msra.mxu0 0.0
        %710 = vmatprep.subr.mxu0 0.0
        %711 = vmatpush1.msra.mxu0 0.0
        %712 = vmatprep.subr.mxu0 0.0
        %713 = vmatpush1.msra.mxu0 0.0
        %714 = vmatprep.subr.mxu0 0.0
        %715 = vmatpush1.msra.mxu0 %v464
        %716 = vmatprep.subr.mxu0 0.0
        %717 = vmatpush1.msra.mxu0 %v463
        %718 = vmatprep.subr.mxu0 0.0
        %719 = vmatpush1.msra.mxu0 %v462
        %720 = vmatprep.subr.mxu0 0.0
        %721 = vmatpush1.msra.mxu0 %v461
        %722 = vmatprep.subr.mxu0 0.0
        %723 = vmatpush2.msra.mxu0 0.0
        %724 = vmatprep.subr.mxu0 0.0
        %725 = vmatpush2.msra.mxu0 0.0
        %726 = vmatprep.subr.mxu0 0.0
        %727 = vmatpush2.msra.mxu0 0.0
        %728 = vmatprep.subr.mxu0 0.0
        %729 = vmatpush2.msra.mxu0 0.0
        %730 = vmatprep.subr.mxu0 0.0
        %731 = vmatpush2.msra.mxu0 0.0
        %732 = vmatprep.subr.mxu0 0.0
        %733 = vmatpush2.msra.mxu0 0.0
        %734 = vmatprep.subr.mxu0 0.0
        %735 = vmatpush2.msra.mxu0 0.0
        %736 = vmatprep.subr.mxu0 0.0
        %737 = vmatpush2.msra.mxu0 0.0
        %738 = vmatprep.subr.mxu0 0.0
        %739 = vmatpush2.msra.mxu0 0.0
        %740 = vmatprep.subr.mxu0 0.0
        %741 = vmatpush2.msra.mxu0 0.0
        %742 = vmatprep.subr.mxu0 0.0
        %743 = vmatpush2.msra.mxu0 0.0
        %744 = vmatprep.subr.mxu0 0.0
        %745 = vmatpush2.msra.mxu0 0.0
        %746 = vmatprep.subr.mxu0 0.0
        %747 = vmatpush2.msra.mxu0 0.0
        %748 = vmatprep.subr.mxu0 0.0
        %749 = vmatpush2.msra.mxu0 0.0
        %750 = vmatprep.subr.mxu0 0.0
        %751 = vmatpush2.msra.mxu0 0.0
        %752 = vmatprep.subr.mxu0 0.0
        %753 = vmatpush2.msra.mxu0 0.0
        %754 = vmatprep.mubr.f32.mxu0 0.0
        %755 = vmatmul.mubr.f32.gmra.mxu0 %v688
        %v756 = vpop.f32.mrf.mxu0
        %v757 = vadd.f32 0.0, %v756
        %v758 = vpop.f32.mrf.mxu0
        %759 = vdwg.mxu0
        %v760 = vadd.f32 %v687, %v757
        %v761 = vsub.f32 0.0, %v760
        %v762 = vmul.f32 %v761, 1.442695
        %v763 = vpow.pop %v762
        %v764 = vadd.f32 %v763, 1.0
        %v765 = vrcp.pop %v764
        %v766 = vmul.f32 1.0, %v765
        %v767 = vtanh.pop %v760
        %v768 = vmul.f32 %v766, %v670
        %770 = vrot.lane.b32.xlu0 %v767, 64
        %v771 = vpop.permute.xlu0 %770
        %v773 = vmul.f32 %v766, %v771
        %775 = vrot.lane.b32.xlu0 %v773, 32
        %v776 = vpop.permute.xlu0 %775
        %v778 = vadd.f32 %v768, %v776
        %v779 = vtanh.pop %v778
        %781 = vrot.lane.b32.xlu0 %v779, 64
        %v782 = vpop.permute.xlu0 %781
        %v784 = vmul.f32 %v766, %v782
        %786 = vrot.lane.b32.xlu0 %v784, 32
        %v787 = vpop.permute.xlu0 %786
        %s789 = scalar_lea.vmem [#allocation3], %s685
        %790 = vst.msk [vmem:[%s789] sm:$0x3] %vm571, %v787
        %s791 = smul.u32 %s575, 3
        %s792 = sadd.s32 %s573, %s791
        %s793 = smul.u32 %s792, 2
        %s794 = scalar_lea.vmem [#allocation2], %s793
        %v795 = vld [vmem:[%s794] sm:$0x3]
        %v796 = vsel %vm377, %v787, 0
        %798 = vmatprep.subr.mxu0 0.0
        %799 = vmatpush1.msra.mxu0 0.0
        %800 = vmatprep.subr.mxu0 0.0
        %801 = vmatpush1.msra.mxu0 0.0
        %802 = vmatprep.subr.mxu0 0.0
        %803 = vmatpush1.msra.mxu0 0.0
        %804 = vmatprep.subr.mxu0 0.0
        %805 = vmatpush1.msra.mxu0 0.0
        %806 = vmatprep.subr.mxu0 0.0
        %807 = vmatpush1.msra.mxu0 0.0
        %808 = vmatprep.subr.mxu0 0.0
        %809 = vmatpush1.msra.mxu0 0.0
        %810 = vmatprep.subr.mxu0 0.0
        %811 = vmatpush1.msra.mxu0 0.0
        %812 = vmatprep.subr.mxu0 0.0
        %813 = vmatpush1.msra.mxu0 0.0
        %814 = vmatprep.subr.mxu0 0.0
        %815 = vmatpush1.msra.mxu0 0.0
        %816 = vmatprep.subr.mxu0 0.0
        %817 = vmatpush1.msra.mxu0 0.0
        %818 = vmatprep.subr.mxu0 0.0
        %819 = vmatpush1.msra.mxu0 0.0
        %820 = vmatprep.subr.mxu0 0.0
        %821 = vmatpush1.msra.mxu0 0.0
        %822 = vmatprep.subr.mxu0 0.0
        %823 = vmatpush1.msra.mxu0 %v464
        %824 = vmatprep.subr.mxu0 0.0
        %825 = vmatpush1.msra.mxu0 %v463
        %826 = vmatprep.subr.mxu0 0.0
        %827 = vmatpush1.msra.mxu0 %v462
        %828 = vmatprep.subr.mxu0 0.0
        %829 = vmatpush1.msra.mxu0 %v461
        %830 = vmatprep.subr.mxu0 0.0
        %831 = vmatpush2.msra.mxu0 0.0
        %832 = vmatprep.subr.mxu0 0.0
        %833 = vmatpush2.msra.mxu0 0.0
        %834 = vmatprep.subr.mxu0 0.0
        %835 = vmatpush2.msra.mxu0 0.0
        %836 = vmatprep.subr.mxu0 0.0
        %837 = vmatpush2.msra.mxu0 0.0
        %838 = vmatprep.subr.mxu0 0.0
        %839 = vmatpush2.msra.mxu0 0.0
        %840 = vmatprep.subr.mxu0 0.0
        %841 = vmatpush2.msra.mxu0 0.0
        %842 = vmatprep.subr.mxu0 0.0
        %843 = vmatpush2.msra.mxu0 0.0
        %844 = vmatprep.subr.mxu0 0.0
        %845 = vmatpush2.msra.mxu0 0.0
        %846 = vmatprep.subr.mxu0 0.0
        %847 = vmatpush2.msra.mxu0 0.0
        %848 = vmatprep.subr.mxu0 0.0
        %849 = vmatpush2.msra.mxu0 0.0
        %850 = vmatprep.subr.mxu0 0.0
        %851 = vmatpush2.msra.mxu0 0.0
        %852 = vmatprep.subr.mxu0 0.0
        %853 = vmatpush2.msra.mxu0 0.0
        %854 = vmatprep.subr.mxu0 0.0
        %855 = vmatpush2.msra.mxu0 0.0
        %856 = vmatprep.subr.mxu0 0.0
        %857 = vmatpush2.msra.mxu0 0.0
        %858 = vmatprep.subr.mxu0 0.0
        %859 = vmatpush2.msra.mxu0 0.0
        %860 = vmatprep.subr.mxu0 0.0
        %861 = vmatpush2.msra.mxu0 0.0
        %862 = vmatprep.mubr.f32.mxu0 0.0
        %863 = vmatmul.mubr.f32.gmra.mxu0 %v796
        %v864 = vpop.f32.mrf.mxu0
        %v865 = vadd.f32 0.0, %v864
        %v866 = vpop.f32.mrf.mxu0
        %867 = vdwg.mxu0
        %v868 = vadd.f32 %v795, %v865
        %v869 = vsub.f32 0.0, %v868
        %v870 = vmul.f32 %v869, 1.442695
        %v871 = vpow.pop %v870
        %v872 = vadd.f32 %v871, 1.0
        %v873 = vrcp.pop %v872
        %v874 = vmul.f32 1.0, %v873
        %v875 = vtanh.pop %v868
        %v876 = vmul.f32 %v874, %v778
        %878 = vrot.lane.b32.xlu0 %v875, 64
        %v879 = vpop.permute.xlu0 %878
        %v881 = vmul.f32 %v874, %v879
        %883 = vrot.lane.b32.xlu0 %v881, 32
        %v884 = vpop.permute.xlu0 %883
        %v886 = vadd.f32 %v876, %v884
        %v887 = vtanh.pop %v886
        %889 = vrot.lane.b32.xlu0 %v887, 64
        %v890 = vpop.permute.xlu0 %889
        %v892 = vmul.f32 %v874, %v890
        %894 = vrot.lane.b32.xlu0 %v892, 32
        %v895 = vpop.permute.xlu0 %894
        %s897 = scalar_lea.vmem [#allocation3], %s793
        %898 = vst.msk [vmem:[%s897] sm:$0x3] %vm571, %v895
        %s899 = smul.u32 %s575, 4
        %s900 = sadd.s32 %s573, %s899
        %s901 = smul.u32 %s900, 2
        %s902 = scalar_lea.vmem [#allocation2], %s901
        %v903 = vld [vmem:[%s902] sm:$0x3]
        %v904 = vsel %vm377, %v895, 0
        %906 = vmatprep.subr.mxu0 0.0
        %907 = vmatpush1.msra.mxu0 0.0
        %908 = vmatprep.subr.mxu0 0.0
        %909 = vmatpush1.msra.mxu0 0.0
        %910 = vmatprep.subr.mxu0 0.0
        %911 = vmatpush1.msra.mxu0 0.0
        %912 = vmatprep.subr.mxu0 0.0
        %913 = vmatpush1.msra.mxu0 0.0
        %914 = vmatprep.subr.mxu0 0.0
        %915 = vmatpush1.msra.mxu0 0.0
        %916 = vmatprep.subr.mxu0 0.0
        %917 = vmatpush1.msra.mxu0 0.0
        %918 = vmatprep.subr.mxu0 0.0
        %919 = vmatpush1.msra.mxu0 0.0
        %920 = vmatprep.subr.mxu0 0.0
        %921 = vmatpush1.msra.mxu0 0.0
        %922 = vmatprep.subr.mxu0 0.0
        %923 = vmatpush1.msra.mxu0 0.0
        %924 = vmatprep.subr.mxu0 0.0
        %925 = vmatpush1.msra.mxu0 0.0
        %926 = vmatprep.subr.mxu0 0.0
        %927 = vmatpush1.msra.mxu0 0.0
        %928 = vmatprep.subr.mxu0 0.0
        %929 = vmatpush1.msra.mxu0 0.0
        %930 = vmatprep.subr.mxu0 0.0
        %931 = vmatpush1.msra.mxu0 %v464
        %932 = vmatprep.subr.mxu0 0.0
        %933 = vmatpush1.msra.mxu0 %v463
        %934 = vmatprep.subr.mxu0 0.0
        %935 = vmatpush1.msra.mxu0 %v462
        %936 = vmatprep.subr.mxu0 0.0
        %937 = vmatpush1.msra.mxu0 %v461
        %938 = vmatprep.subr.mxu0 0.0
        %939 = vmatpush2.msra.mxu0 0.0
        %940 = vmatprep.subr.mxu0 0.0
        %941 = vmatpush2.msra.mxu0 0.0
        %942 = vmatprep.subr.mxu0 0.0
        %943 = vmatpush2.msra.mxu0 0.0
        %944 = vmatprep.subr.mxu0 0.0
        %945 = vmatpush2.msra.mxu0 0.0
        %946 = vmatprep.subr.mxu0 0.0
        %947 = vmatpush2.msra.mxu0 0.0
        %948 = vmatprep.subr.mxu0 0.0
        %949 = vmatpush2.msra.mxu0 0.0
        %950 = vmatprep.subr.mxu0 0.0
        %951 = vmatpush2.msra.mxu0 0.0
        %952 = vmatprep.subr.mxu0 0.0
        %953 = vmatpush2.msra.mxu0 0.0
        %954 = vmatprep.subr.mxu0 0.0
        %955 = vmatpush2.msra.mxu0 0.0
        %956 = vmatprep.subr.mxu0 0.0
        %957 = vmatpush2.msra.mxu0 0.0
        %958 = vmatprep.subr.mxu0 0.0
        %959 = vmatpush2.msra.mxu0 0.0
        %960 = vmatprep.subr.mxu0 0.0
        %961 = vmatpush2.msra.mxu0 0.0
        %962 = vmatprep.subr.mxu0 0.0
        %963 = vmatpush2.msra.mxu0 0.0
        %964 = vmatprep.subr.mxu0 0.0
        %965 = vmatpush2.msra.mxu0 0.0
        %966 = vmatprep.subr.mxu0 0.0
        %967 = vmatpush2.msra.mxu0 0.0
        %968 = vmatprep.subr.mxu0 0.0
        %969 = vmatpush2.msra.mxu0 0.0
        %970 = vmatprep.mubr.f32.mxu0 0.0
        %971 = vmatmul.mubr.f32.gmra.mxu0 %v904
        %v972 = vpop.f32.mrf.mxu0
        %v973 = vadd.f32 0.0, %v972
        %v974 = vpop.f32.mrf.mxu0
        %975 = vdwg.mxu0
        %v976 = vadd.f32 %v903, %v973
        %v977 = vsub.f32 0.0, %v976
        %v978 = vmul.f32 %v977, 1.442695
        %v979 = vpow.pop %v978
        %v980 = vadd.f32 %v979, 1.0
        %v981 = vrcp.pop %v980
        %v982 = vmul.f32 1.0, %v981
        %v983 = vtanh.pop %v976
        %v984 = vmul.f32 %v982, %v886
        %986 = vrot.lane.b32.xlu0 %v983, 64
        %v987 = vpop.permute.xlu0 %986
        %v989 = vmul.f32 %v982, %v987
        %991 = vrot.lane.b32.xlu0 %v989, 32
        %v992 = vpop.permute.xlu0 %991
        %v994 = vadd.f32 %v984, %v992
        %v995 = vtanh.pop %v994
        %997 = vrot.lane.b32.xlu0 %v995, 64
        %v998 = vpop.permute.xlu0 %997
        %v1000 = vmul.f32 %v982, %v998
        %1002 = vrot.lane.b32.xlu0 %v1000, 32
        %v1003 = vpop.permute.xlu0 %1002
        %s1005 = scalar_lea.vmem [#allocation3], %s901
        %1006 = vst.msk [vmem:[%s1005] sm:$0x3] %vm571, %v1003
        %s1007 = smul.u32 %s575, 5
        %s1008 = sadd.s32 %s573, %s1007
        %s1009 = smul.u32 %s1008, 2
        %s1010 = scalar_lea.vmem [#allocation2], %s1009
        %v1011 = vld [vmem:[%s1010] sm:$0x3]
        %v1012 = vsel %vm377, %v1003, 0
        %1014 = vmatprep.subr.mxu0 0.0
        %1015 = vmatpush1.msra.mxu0 0.0
        %1016 = vmatprep.subr.mxu0 0.0
        %1017 = vmatpush1.msra.mxu0 0.0
        %1018 = vmatprep.subr.mxu0 0.0
        %1019 = vmatpush1.msra.mxu0 0.0
        %1020 = vmatprep.subr.mxu0 0.0
        %1021 = vmatpush1.msra.mxu0 0.0
        %1022 = vmatprep.subr.mxu0 0.0
        %1023 = vmatpush1.msra.mxu0 0.0
        %1024 = vmatprep.subr.mxu0 0.0
        %1025 = vmatpush1.msra.mxu0 0.0
        %1026 = vmatprep.subr.mxu0 0.0
        %1027 = vmatpush1.msra.mxu0 0.0
        %1028 = vmatprep.subr.mxu0 0.0
        %1029 = vmatpush1.msra.mxu0 0.0
        %1030 = vmatprep.subr.mxu0 0.0
        %1031 = vmatpush1.msra.mxu0 0.0
        %1032 = vmatprep.subr.mxu0 0.0
        %1033 = vmatpush1.msra.mxu0 0.0
        %1034 = vmatprep.subr.mxu0 0.0
        %1035 = vmatpush1.msra.mxu0 0.0
        %1036 = vmatprep.subr.mxu0 0.0
        %1037 = vmatpush1.msra.mxu0 0.0
        %1038 = vmatprep.subr.mxu0 0.0
        %1039 = vmatpush1.msra.mxu0 %v464
        %1040 = vmatprep.subr.mxu0 0.0
        %1041 = vmatpush1.msra.mxu0 %v463
        %1042 = vmatprep.subr.mxu0 0.0
        %1043 = vmatpush1.msra.mxu0 %v462
        %1044 = vmatprep.subr.mxu0 0.0
        %1045 = vmatpush1.msra.mxu0 %v461
        %1046 = vmatprep.subr.mxu0 0.0
        %1047 = vmatpush2.msra.mxu0 0.0
        %1048 = vmatprep.subr.mxu0 0.0
        %1049 = vmatpush2.msra.mxu0 0.0
        %1050 = vmatprep.subr.mxu0 0.0
        %1051 = vmatpush2.msra.mxu0 0.0
        %1052 = vmatprep.subr.mxu0 0.0
        %1053 = vmatpush2.msra.mxu0 0.0
        %1054 = vmatprep.subr.mxu0 0.0
        %1055 = vmatpush2.msra.mxu0 0.0
        %1056 = vmatprep.subr.mxu0 0.0
        %1057 = vmatpush2.msra.mxu0 0.0
        %1058 = vmatprep.subr.mxu0 0.0
        %1059 = vmatpush2.msra.mxu0 0.0
        %1060 = vmatprep.subr.mxu0 0.0
        %1061 = vmatpush2.msra.mxu0 0.0
        %1062 = vmatprep.subr.mxu0 0.0
        %1063 = vmatpush2.msra.mxu0 0.0
        %1064 = vmatprep.subr.mxu0 0.0
        %1065 = vmatpush2.msra.mxu0 0.0
        %1066 = vmatprep.subr.mxu0 0.0
        %1067 = vmatpush2.msra.mxu0 0.0
        %1068 = vmatprep.subr.mxu0 0.0
        %1069 = vmatpush2.msra.mxu0 0.0
        %1070 = vmatprep.subr.mxu0 0.0
        %1071 = vmatpush2.msra.mxu0 0.0
        %1072 = vmatprep.subr.mxu0 0.0
        %1073 = vmatpush2.msra.mxu0 0.0
        %1074 = vmatprep.subr.mxu0 0.0
        %1075 = vmatpush2.msra.mxu0 0.0
        %1076 = vmatprep.subr.mxu0 0.0
        %1077 = vmatpush2.msra.mxu0 0.0
        %1078 = vmatprep.mubr.f32.mxu0 0.0
        %1079 = vmatmul.mubr.f32.gmra.mxu0 %v1012
        %v1080 = vpop.f32.mrf.mxu0
        %v1081 = vadd.f32 0.0, %v1080
        %v1082 = vpop.f32.mrf.mxu0
        %1083 = vdwg.mxu0
        %v1084 = vadd.f32 %v1011, %v1081
        %v1085 = vsub.f32 0.0, %v1084
        %v1086 = vmul.f32 %v1085, 1.442695
        %v1087 = vpow.pop %v1086
        %v1088 = vadd.f32 %v1087, 1.0
        %v1089 = vrcp.pop %v1088
        %v1090 = vmul.f32 1.0, %v1089
        %v1091 = vtanh.pop %v1084
        %v1092 = vmul.f32 %v1090, %v994
        %1094 = vrot.lane.b32.xlu0 %v1091, 64
        %v1095 = vpop.permute.xlu0 %1094
        %v1097 = vmul.f32 %v1090, %v1095
        %1099 = vrot.lane.b32.xlu0 %v1097, 32
        %v1100 = vpop.permute.xlu0 %1099
        %v1102 = vadd.f32 %v1092, %v1100
        %v1103 = vtanh.pop %v1102
        %1105 = vrot.lane.b32.xlu0 %v1103, 64
        %v1106 = vpop.permute.xlu0 %1105
        %v1108 = vmul.f32 %v1090, %v1106
        %1110 = vrot.lane.b32.xlu0 %v1108, 32
        %v1111 = vpop.permute.xlu0 %1110
        %s1113 = scalar_lea.vmem [#allocation3], %s1009
        %1114 = vst.msk [vmem:[%s1113] sm:$0x3] %vm571, %v1111
        %s1115 = smul.u32 %s575, 6
        %s1116 = sadd.s32 %s573, %s1115
        %s1117 = smul.u32 %s1116, 2
        %s1118 = scalar_lea.vmem [#allocation2], %s1117
        %v1119 = vld [vmem:[%s1118] sm:$0x3]
        %v1120 = vsel %vm377, %v1111, 0
        %1122 = vmatprep.subr.mxu0 0.0
        %1123 = vmatpush1.msra.mxu0 0.0
        %1124 = vmatprep.subr.mxu0 0.0
        %1125 = vmatpush1.msra.mxu0 0.0
        %1126 = vmatprep.subr.mxu0 0.0
        %1127 = vmatpush1.msra.mxu0 0.0
        %1128 = vmatprep.subr.mxu0 0.0
        %1129 = vmatpush1.msra.mxu0 0.0
        %1130 = vmatprep.subr.mxu0 0.0
        %1131 = vmatpush1.msra.mxu0 0.0
        %1132 = vmatprep.subr.mxu0 0.0
        %1133 = vmatpush1.msra.mxu0 0.0
        %1134 = vmatprep.subr.mxu0 0.0
        %1135 = vmatpush1.msra.mxu0 0.0
        %1136 = vmatprep.subr.mxu0 0.0
        %1137 = vmatpush1.msra.mxu0 0.0
        %1138 = vmatprep.subr.mxu0 0.0
        %1139 = vmatpush1.msra.mxu0 0.0
        %1140 = vmatprep.subr.mxu0 0.0
        %1141 = vmatpush1.msra.mxu0 0.0
        %1142 = vmatprep.subr.mxu0 0.0
        %1143 = vmatpush1.msra.mxu0 0.0
        %1144 = vmatprep.subr.mxu0 0.0
        %1145 = vmatpush1.msra.mxu0 0.0
        %1146 = vmatprep.subr.mxu0 0.0
        %1147 = vmatpush1.msra.mxu0 %v464
        %1148 = vmatprep.subr.mxu0 0.0
        %1149 = vmatpush1.msra.mxu0 %v463
        %1150 = vmatprep.subr.mxu0 0.0
        %1151 = vmatpush1.msra.mxu0 %v462
        %1152 = vmatprep.subr.mxu0 0.0
        %1153 = vmatpush1.msra.mxu0 %v461
        %1154 = vmatprep.subr.mxu0 0.0
        %1155 = vmatpush2.msra.mxu0 0.0
        %1156 = vmatprep.subr.mxu0 0.0
        %1157 = vmatpush2.msra.mxu0 0.0
        %1158 = vmatprep.subr.mxu0 0.0
        %1159 = vmatpush2.msra.mxu0 0.0
        %1160 = vmatprep.subr.mxu0 0.0
        %1161 = vmatpush2.msra.mxu0 0.0
        %1162 = vmatprep.subr.mxu0 0.0
        %1163 = vmatpush2.msra.mxu0 0.0
        %1164 = vmatprep.subr.mxu0 0.0
        %1165 = vmatpush2.msra.mxu0 0.0
        %1166 = vmatprep.subr.mxu0 0.0
        %1167 = vmatpush2.msra.mxu0 0.0
        %1168 = vmatprep.subr.mxu0 0.0
        %1169 = vmatpush2.msra.mxu0 0.0
        %1170 = vmatprep.subr.mxu0 0.0
        %1171 = vmatpush2.msra.mxu0 0.0
        %1172 = vmatprep.subr.mxu0 0.0
        %1173 = vmatpush2.msra.mxu0 0.0
        %1174 = vmatprep.subr.mxu0 0.0
        %1175 = vmatpush2.msra.mxu0 0.0
        %1176 = vmatprep.subr.mxu0 0.0
        %1177 = vmatpush2.msra.mxu0 0.0
        %1178 = vmatprep.subr.mxu0 0.0
        %1179 = vmatpush2.msra.mxu0 0.0
        %1180 = vmatprep.subr.mxu0 0.0
        %1181 = vmatpush2.msra.mxu0 0.0
        %1182 = vmatprep.subr.mxu0 0.0
        %1183 = vmatpush2.msra.mxu0 0.0
        %1184 = vmatprep.subr.mxu0 0.0
        %1185 = vmatpush2.msra.mxu0 0.0
        %1186 = vmatprep.mubr.f32.mxu0 0.0
        %1187 = vmatmul.mubr.f32.gmra.mxu0 %v1120
        %v1188 = vpop.f32.mrf.mxu0
        %v1189 = vadd.f32 0.0, %v1188
        %v1190 = vpop.f32.mrf.mxu0
        %1191 = vdwg.mxu0
        %v1192 = vadd.f32 %v1119, %v1189
        %v1193 = vsub.f32 0.0, %v1192
        %v1194 = vmul.f32 %v1193, 1.442695
        %v1195 = vpow.pop %v1194
        %v1196 = vadd.f32 %v1195, 1.0
        %v1197 = vrcp.pop %v1196
        %v1198 = vmul.f32 1.0, %v1197
        %v1199 = vtanh.pop %v1192
        %v1200 = vmul.f32 %v1198, %v1102
        %1202 = vrot.lane.b32.xlu0 %v1199, 64
        %v1203 = vpop.permute.xlu0 %1202
        %v1205 = vmul.f32 %v1198, %v1203
        %1207 = vrot.lane.b32.xlu0 %v1205, 32
        %v1208 = vpop.permute.xlu0 %1207
        %v1210 = vadd.f32 %v1200, %v1208
        %v1211 = vtanh.pop %v1210
        %1213 = vrot.lane.b32.xlu0 %v1211, 64
        %v1214 = vpop.permute.xlu0 %1213
        %v1216 = vmul.f32 %v1198, %v1214
        %1218 = vrot.lane.b32.xlu0 %v1216, 32
        %v1219 = vpop.permute.xlu0 %1218
        %s1221 = scalar_lea.vmem [#allocation3], %s1117
        %1222 = vst.msk [vmem:[%s1221] sm:$0x3] %vm571, %v1219
        %s1223 = smul.u32 %s575, 7
        %s1224 = sadd.s32 %s573, %s1223
        %s1225 = smul.u32 %s1224, 2
        %s1226 = scalar_lea.vmem [#allocation2], %s1225
        %v1227 = vld [vmem:[%s1226] sm:$0x3]
        %v1228 = vsel %vm377, %v1219, 0
        %1230 = vmatprep.subr.mxu0 0.0
        %1231 = vmatpush1.msra.mxu0 0.0
        %1232 = vmatprep.subr.mxu0 0.0
        %1233 = vmatpush1.msra.mxu0 0.0
        %1234 = vmatprep.subr.mxu0 0.0
        %1235 = vmatpush1.msra.mxu0 0.0
        %1236 = vmatprep.subr.mxu0 0.0
        %1237 = vmatpush1.msra.mxu0 0.0
        %1238 = vmatprep.subr.mxu0 0.0
        %1239 = vmatpush1.msra.mxu0 0.0
        %1240 = vmatprep.subr.mxu0 0.0
        %1241 = vmatpush1.msra.mxu0 0.0
        %1242 = vmatprep.subr.mxu0 0.0
        %1243 = vmatpush1.msra.mxu0 0.0
        %1244 = vmatprep.subr.mxu0 0.0
        %1245 = vmatpush1.msra.mxu0 0.0
        %1246 = vmatprep.subr.mxu0 0.0
        %1247 = vmatpush1.msra.mxu0 0.0
        %1248 = vmatprep.subr.mxu0 0.0
        %1249 = vmatpush1.msra.mxu0 0.0
        %1250 = vmatprep.subr.mxu0 0.0
        %1251 = vmatpush1.msra.mxu0 0.0
        %1252 = vmatprep.subr.mxu0 0.0
        %1253 = vmatpush1.msra.mxu0 0.0
        %1254 = vmatprep.subr.mxu0 0.0
        %1255 = vmatpush1.msra.mxu0 %v464
        %1256 = vmatprep.subr.mxu0 0.0
        %1257 = vmatpush1.msra.mxu0 %v463
        %1258 = vmatprep.subr.mxu0 0.0
        %1259 = vmatpush1.msra.mxu0 %v462
        %1260 = vmatprep.subr.mxu0 0.0
        %1261 = vmatpush1.msra.mxu0 %v461
        %1262 = vmatprep.subr.mxu0 0.0
        %1263 = vmatpush2.msra.mxu0 0.0
        %1264 = vmatprep.subr.mxu0 0.0
        %1265 = vmatpush2.msra.mxu0 0.0
        %1266 = vmatprep.subr.mxu0 0.0
        %1267 = vmatpush2.msra.mxu0 0.0
        %1268 = vmatprep.subr.mxu0 0.0
        %1269 = vmatpush2.msra.mxu0 0.0
        %1270 = vmatprep.subr.mxu0 0.0
        %1271 = vmatpush2.msra.mxu0 0.0
        %1272 = vmatprep.subr.mxu0 0.0
        %1273 = vmatpush2.msra.mxu0 0.0
        %1274 = vmatprep.subr.mxu0 0.0
        %1275 = vmatpush2.msra.mxu0 0.0
        %1276 = vmatprep.subr.mxu0 0.0
        %1277 = vmatpush2.msra.mxu0 0.0
        %1278 = vmatprep.subr.mxu0 0.0
        %1279 = vmatpush2.msra.mxu0 0.0
        %1280 = vmatprep.subr.mxu0 0.0
        %1281 = vmatpush2.msra.mxu0 0.0
        %1282 = vmatprep.subr.mxu0 0.0
        %1283 = vmatpush2.msra.mxu0 0.0
        %1284 = vmatprep.subr.mxu0 0.0
        %1285 = vmatpush2.msra.mxu0 0.0
        %1286 = vmatprep.subr.mxu0 0.0
        %1287 = vmatpush2.msra.mxu0 0.0
        %1288 = vmatprep.subr.mxu0 0.0
        %1289 = vmatpush2.msra.mxu0 0.0
        %1290 = vmatprep.subr.mxu0 0.0
        %1291 = vmatpush2.msra.mxu0 0.0
        %1292 = vmatprep.subr.mxu0 0.0
        %1293 = vmatpush2.msra.mxu0 0.0
        %1294 = vmatprep.mubr.f32.mxu0 0.0
        %1295 = vmatmul.mubr.f32.gmra.mxu0 %v1228
        %v1296 = vpop.f32.mrf.mxu0
        %v1297 = vadd.f32 0.0, %v1296
        %v1298 = vpop.f32.mrf.mxu0
        %1299 = vdwg.mxu0
        %v1300 = vadd.f32 %v1227, %v1297
        %v1301 = vsub.f32 0.0, %v1300
        %v1302 = vmul.f32 %v1301, 1.442695
        %v1303 = vpow.pop %v1302
        %v1304 = vadd.f32 %v1303, 1.0
        %v1305 = vrcp.pop %v1304
        %v1306 = vmul.f32 1.0, %v1305
        %v1307 = vtanh.pop %v1300
        %v1308 = vmul.f32 %v1306, %v1210
        %1310 = vrot.lane.b32.xlu0 %v1307, 64
        %v1311 = vpop.permute.xlu0 %1310
        %v1313 = vmul.f32 %v1306, %v1311
        %1315 = vrot.lane.b32.xlu0 %v1313, 32
        %v1316 = vpop.permute.xlu0 %1315
        %v1318 = vadd.f32 %v1308, %v1316
        %v1319 = vtanh.pop %v1318
        %1321 = vrot.lane.b32.xlu0 %v1319, 64
        %v1322 = vpop.permute.xlu0 %1321
        %v1324 = vmul.f32 %v1306, %v1322
        %1326 = vrot.lane.b32.xlu0 %v1324, 32
        %v1327 = vpop.permute.xlu0 %1326
        %s1329 = scalar_lea.vmem [#allocation3], %s1225
        %1330 = vst.msk [vmem:[%s1329] sm:$0x3] %vm571, %v1327
        %v1331 = vld [vmem:[#allocation3] sm:$0xff]
        %v1332 = vld [vmem:[#allocation3 + $0x8] sm:$0xff]
        %v1333 = vld [vmem:[%s324] sm:$0xff]
        %v1334 = vld [vmem:[%s324 + $0x8] sm:$0xff]
        %v1335 = vld [vmem:[%s324 + $0x10] sm:$0xff]
        %v1336 = vld [vmem:[%s324 + $0x18] sm:$0xff]
        %v1338 = vsel %vm377, %v1331, 0
        %v1341 = vsel %vm377, %v1332, 0
        %1343 = vmatprep.subr.mxu0 0.0
        %1344 = vmatpush1.msra.mxu0 0.0
        %1345 = vmatprep.subr.mxu0 0.0
        %1346 = vmatpush1.msra.mxu0 0.0
        %1347 = vmatprep.subr.mxu0 0.0
        %1348 = vmatpush1.msra.mxu0 0.0
        %1349 = vmatprep.subr.mxu0 0.0
        %1350 = vmatpush1.msra.mxu0 0.0
        %1351 = vmatprep.subr.mxu0 0.0
        %1352 = vmatpush1.msra.mxu0 0.0
        %1353 = vmatprep.subr.mxu0 0.0
        %1354 = vmatpush1.msra.mxu0 0.0
        %1355 = vmatprep.subr.mxu0 0.0
        %1356 = vmatpush1.msra.mxu0 0.0
        %1357 = vmatprep.subr.mxu0 0.0
        %1358 = vmatpush1.msra.mxu0 0.0
        %1359 = vmatprep.subr.mxu0 0.0
        %1360 = vmatpush1.msra.mxu0 0.0
        %1361 = vmatprep.subr.mxu0 0.0
        %1362 = vmatpush1.msra.mxu0 0.0
        %1363 = vmatprep.subr.mxu0 0.0
        %1364 = vmatpush1.msra.mxu0 0.0
        %1365 = vmatprep.subr.mxu0 0.0
        %1366 = vmatpush1.msra.mxu0 0.0
        %1367 = vmatprep.subr.mxu0 0.0
        %1368 = vmatpush1.msra.mxu0 %v1336
        %1369 = vmatprep.subr.mxu0 0.0
        %1370 = vmatpush1.msra.mxu0 %v1335
        %1371 = vmatprep.subr.mxu0 0.0
        %1372 = vmatpush1.msra.mxu0 %v1334
        %1373 = vmatprep.subr.mxu0 0.0
        %1374 = vmatpush1.msra.mxu0 %v1333
        %1375 = vmatprep.subr.mxu0 0.0
        %1376 = vmatpush2.msra.mxu0 0.0
        %1377 = vmatprep.subr.mxu0 0.0
        %1378 = vmatpush2.msra.mxu0 0.0
        %1379 = vmatprep.subr.mxu0 0.0
        %1380 = vmatpush2.msra.mxu0 0.0
        %1381 = vmatprep.subr.mxu0 0.0
        %1382 = vmatpush2.msra.mxu0 0.0
        %1383 = vmatprep.subr.mxu0 0.0
        %1384 = vmatpush2.msra.mxu0 0.0
        %1385 = vmatprep.subr.mxu0 0.0
        %1386 = vmatpush2.msra.mxu0 0.0
        %1387 = vmatprep.subr.mxu0 0.0
        %1388 = vmatpush2.msra.mxu0 0.0
        %1389 = vmatprep.subr.mxu0 0.0
        %1390 = vmatpush2.msra.mxu0 0.0
        %1391 = vmatprep.subr.mxu0 0.0
        %1392 = vmatpush2.msra.mxu0 0.0
        %1393 = vmatprep.subr.mxu0 0.0
        %1394 = vmatpush2.msra.mxu0 0.0
        %1395 = vmatprep.subr.mxu0 0.0
        %1396 = vmatpush2.msra.mxu0 0.0
        %1397 = vmatprep.subr.mxu0 0.0
        %1398 = vmatpush2.msra.mxu0 0.0
        %1399 = vmatprep.subr.mxu0 0.0
        %1400 = vmatpush2.msra.mxu0 0.0
        %1401 = vmatprep.subr.mxu0 0.0
        %1402 = vmatpush2.msra.mxu0 0.0
        %1403 = vmatprep.subr.mxu0 0.0
        %1404 = vmatpush2.msra.mxu0 0.0
        %1405 = vmatprep.subr.mxu0 0.0
        %1406 = vmatpush2.msra.mxu0 0.0
        %1407 = vmatprep.mubr.f32.mxu0 0.0
        %1408 = vmatmul.mubr.f32.gmra.mxu0 %v1338
        %v1409 = vpop.f32.mrf.mxu0
        %v1410 = vadd.f32 0.0, %v1409
        %v1411 = vpop.f32.mrf.mxu0
        %1412 = vmatprep.mubr.f32.mxu0 0.0
        %1413 = vmatmul.mubr.f32.gmra.mxu0 %v1341
        %v1414 = vpop.f32.mrf.mxu0
        %v1415 = vadd.f32 0.0, %v1414
        %v1416 = vpop.f32.mrf.mxu0
        %1417 = vdwg.mxu0
        %p1418 = scmp.eq.s32.totalorder %s25, 0
        // Predicated region
        $region61: #{tpu_custom_call.1} parent=43 // pred_check
          %p1419 = pneg %p1418
        $region62: #{tpu_custom_call.1} parent=43 // pred_check_branch
          %1421 = sbr.rel (%p1419) target = $region64
        $region63: #{tpu_custom_call.1} parent=43 // pred_region
          %v1422 = vld [vmem:[%s5] sm:$0x1]
          %v1424 = vlaneseq
          %v1425 = vshrl.u32 %v1424, 7
          %v1426 = vsub.s32 0, %v1425
          %v1427 = vrot.slane %v1422, %v1426
          %v1429 = vadd.f32 %v1410, %v1427
          %v1430 = vadd.f32 %v1415, %v1427
          %1431 = vst.msk [vmem:[#allocation4] sm:$0xff] %vm377, %v1429
          %1432 = vst.msk [vmem:[#allocation4 + $0x8] sm:$0xff] %vm377, %v1430
        $region64: #{tpu_custom_call.1} parent=43 // pred_fallthru
          _
        %p1433 = scmp.eq.s32.totalorder %s25, 1
        // Predicated region
        $region65: #{tpu_custom_call.1} parent=43 // pred_check
          %p1434 = pneg %p1433
        $region66: #{tpu_custom_call.1} parent=43 // pred_check_branch
          %1436 = sbr.rel (%p1434) target = $region68
        $region67: #{tpu_custom_call.1} parent=43 // pred_region
          %v1437 = vld [vmem:[#allocation4] sm:$0xff]
          %v1438 = vld [vmem:[#allocation4 + $0x8] sm:$0xff]
          %v1439 = vadd.f32 %v1437, %v1410
          %v1440 = vadd.f32 %v1438, %v1415
          %1441 = vst.msk [vmem:[#allocation13] sm:$0xff] %vm377, %v1439
          %1442 = vst.msk [vmem:[#allocation13 + $0x8] sm:$0xff] %vm377, %v1440
        $region68: #{tpu_custom_call.1} parent=43 // pred_fallthru
          _
        // Predicated region
        $region69: #{tpu_custom_call.1} parent=43 // pred_check
          %p1443 = pneg %p184
        $region70: #{tpu_custom_call.1} parent=43 // pred_check_branch
          %1445 = sbr.rel (%p1443) target = $region72
        $region71: #{tpu_custom_call.1} parent=43 // pred_region
          %s1447 = ssub.s32 256, 256
          %1448 = vsyncadd [#allocation7], %s1447
          %s1449 = sshll.u32 [#allocation13], 4
          %s1450 = int_to_ptr.vmem [resolvable:$true] %s1449
          %1455 = dma.vmem_to_hbm [thread:$0]  %s1450, 256, %s6, [#allocation7], 128, 128, 8
        $region72: #{tpu_custom_call.1} parent=43 // pred_fallthru
          _
        // Predicated region
        $region73: #{tpu_custom_call.1} parent=43 // pred_check
          %p1456 = pneg %p184
        $region74: #{tpu_custom_call.1} parent=43 // pred_check_branch
          %1458 = sbr.rel (%p1456) target = $region76
        $region75: #{tpu_custom_call.1} parent=43 // pred_region
          %1459 = dma.done [#allocation7], 256
        $region76: #{tpu_custom_call.1} parent=43 // pred_fallthru
          _
      $region44: #{tpu_custom_call.1} parent=5 // pred_fallthru
        _
      %p1460 = scmp.le.s32.totalorder 2, %s20
      // Predicated region
      $region77: #{tpu_custom_call.1} parent=5 // pred_check
        %p1461 = pneg %p1460
      $region78: #{tpu_custom_call.1} parent=5 // pred_check_branch
        %1463 = sbr.rel (%p1461) target = $region80
      $region79: #{tpu_custom_call.1} parent=5 // pred_region
        %s1464 = ssub.s32 %s20, 2
      $region80: #{tpu_custom_call.1} parent=5 // pred_fallthru
        _
    $region6: #{tpu_custom_call.1} parent=1 // loop_footer
      %s24 = sadd.s32 1, %s20
    $region7: #{tpu_custom_call.1} parent=1 // loop_footer_branch
      %19 = sbr.rel target = $region3
    $region8: #{tpu_custom_call.1} parent=1 // loop_exit
      _
    %1465 = vsyncpa [#allocation6], 1
    %s1466 = scalar_lea.sflag [#allocation6], 1
    %1467 = vsyncpa %s1466, 1
    %1468 = vsyncpa [#allocation9], 1
    %s1469 = scalar_lea.sflag [#allocation9], 1
    %1470 = vsyncpa %s1469, 1
    %1471 = vsyncpa [#allocation12], 1
    %s1472 = scalar_lea.sflag [#allocation12], 1
    %1473 = vsyncpa %s1472, 1
    %1474 = vsyncpa [#allocation7], 1
    %s1475 = scalar_lea.sflag [#allocation7], 1
    %1476 = vsyncpa %s1475, 1

</llo_original>
